<compile_context>
chip_gen: v7x
topology: tpu7x:2x2x1
jax: 0.10.0
libtpu: 0.0.40
codegen_flags: <defaults>
</compile_context>

<pallas_src>
import functools
import math

import jax
import jax.numpy as jnp
import numpy as np
from jax import lax
from jax.experimental import pallas as pl
from jax.experimental.pallas import tpu as pltpu


def _round_up(x, m):
    return ((x + m - 1) // m) * m


def _pick_batch_tiles(batch, max_tile=128):
    """Returns (B_pad, batch_tile, num_batch_tiles), B_pad = tiles * tile."""
    b_pad = _round_up(max(batch, 8), 8)           # f32 sublane granularity
    if b_pad <= max_tile:
        return b_pad, b_pad, 1
    b_pad = _round_up(b_pad, max_tile)
    return b_pad, max_tile, b_pad // max_tile


def _pick_time_chunk(seq_len, b_tile, max_chunk=64, target_rows=256):
    """Returns (t_chunk, n_chunks, padded_seq_len).

    Targets t_chunk*b_tile >= target_rows (fill MXU M on v6e/v7x) without
    padding the *serial* time axis just to get there; balances chunks so a
    ragged tail never collapses to per-timestep grid steps.
    """
    t0 = max(1, min(max_chunk, max(1, target_rows // b_tile), seq_len))
    n_chunks = -(-seq_len // t0)                  # cdiv
    t_chunk = -(-seq_len // n_chunks)             # balanced; pad < n_chunks
    return t_chunk, n_chunks, n_chunks * t_chunk


def _to_tiled_rows(x, s_pad, b_pad, b_tile):
    """(S, B, I) -> (num_batch_tiles, S_pad*b_tile, I), rows = (time, batch)."""
    s, b, i = x.shape
    x = jnp.pad(x, ((0, s_pad - s), (0, b_pad - b), (0, 0)))
    nbt = b_pad // b_tile
    x = x.reshape(s_pad, nbt, b_tile, i).transpose(1, 0, 2, 3)
    return x.reshape(nbt, s_pad * b_tile, i).astype(jnp.float32)


def _from_tiled_rows(y, seq_len, batch, s_pad, b_tile):
    """(num_batch_tiles, S_pad*b_tile, H) -> (S, B, H)."""
    nbt, _, h = y.shape
    y = y.reshape(nbt, s_pad, b_tile, h).transpose(1, 0, 2, 3)
    return y.reshape(s_pad, nbt * b_tile, h)[:seq_len, :batch]


def _pad_state(s, b_pad, b_tile):
    b, h = s.shape
    s = jnp.pad(s, ((0, b_pad - b), (0, 0)))
    return s.reshape(b_pad // b_tile, b_tile, h).astype(jnp.float32)


# ------------------------------- kernel body -------------------------------
def _lstm_layer_kernel(x_ref, wih_hbm, whh_hbm, b_ref, h0_ref, c0_ref,
                       out_ref, cN_ref,
                       h_scr, c_scr, gx_scr, wih_vmem, whh_vmem, dma_sem,
                       *, hidden, t_chunk, b_tile, seq_len, masked):
    """One (batch-tile, time-chunk) grid step of a single LSTM layer.

    x_ref    : (t_chunk*b_tile, I_pad) f32   flattened (time, batch) rows
    wih_hbm  : (I_pad, 4H) bf16  HBM (pl.ANY) — copied once into wih_vmem
    whh_hbm  : (H, 4H)   f32     HBM (pl.ANY) — copied once into whh_vmem
    b_ref    : (1, 4H)   f32     b_ih + b_hh, gate order [i, f, o, g]
    h0/c0    : (b_tile, H) f32   initial states for this batch tile
    out_ref  : (t_chunk*b_tile, H) f32
    cN_ref   : (b_tile, H) f32   final cell state (written at last chunk)
    """
    n = pl.program_id(1)
    H = hidden

    @pl.when(n == 0)
    def _():
        # Single-buffered grid-invariant weights: one manual DMA instead of
        # BlockSpec double-buffering (halves the resident-weight VMEM).
        cp_ih = pltpu.make_async_copy(wih_hbm, wih_vmem, dma_sem.at[0])
        cp_hh = pltpu.make_async_copy(whh_hbm, whh_vmem, dma_sem.at[1])
        cp_ih.start()
        cp_hh.start()
        cp_ih.wait()
        cp_hh.wait()
        h_scr[...] = h0_ref[...]
        c_scr[...] = c0_ref[...]

    # ---- Phase 1 (hoisted off the serial path): input projection + bias for
    # the whole chunk as one well-shaped (rows, I) x (I, 4H) matmul.
    gx_scr[...] = (
        jnp.dot(x_ref[...].astype(jnp.bfloat16), wih_vmem[...],
                preferred_element_type=jnp.float32)
        + b_ref[...])

    whh = whh_vmem[...]            # f32: no per-step cast of the carried state
    base_t = n * t_chunk

    # ---- Phase 2: serial recurrence over the chunk; h/c carried in registers.
    def step(t, carry):
        h, c = carry
        off = pl.multiple_of(t * b_tile, b_tile)
        gates = gx_scr[pl.ds(off, b_tile), :] + jnp.dot(
            h, whh, preferred_element_type=jnp.float32)
        # Gate order [i, f, o, g]: sigmoid over 3H, tanh over H only.
        sig = jax.nn.sigmoid(gates[:, :3 * H])
        i_g = sig[:, 0 * H:1 * H]
        f_g = sig[:, 1 * H:2 * H]
        o_g = sig[:, 2 * H:3 * H]
        g_g = jnp.tanh(gates[:, 3 * H:])
        c_new = f_g * c + i_g * g_g
        h_new = o_g * jnp.tanh(c_new)
        if masked:  # static: only emitted when the time axis was padded
            valid = (base_t + t) < seq_len
            h_new = jnp.where(valid, h_new, h)
            c_new = jnp.where(valid, c_new, c)
        out_ref[pl.ds(off, b_tile), :] = h_new
        return h_new, c_new

    h_fin, c_fin = lax.fori_loop(0, t_chunk, step,
                                 (h_scr[...], c_scr[...]), unroll=True)
    h_scr[...] = h_fin
    c_scr[...] = c_fin

    @pl.when(n == pl.num_programs(1) - 1)
    def _():
        cN_ref[...] = c_fin


# ------------------------------ layer wrapper ------------------------------
def _lstm_layer_pallas(x3, w_ih, w_hh, b_ih, b_hh, h0t, c0t, *,
                       seq_len, t_chunk, n_chunks, b_tile):
    """x3: (nbt, S_pad*b_tile, I). Returns (out3 same layout with H, cN3)."""
    nbt, _, in_dim = x3.shape
    H = w_hh.shape[1]
    rows = t_chunk * b_tile
    in_pad = _round_up(in_dim, 8)

    # Gate-column permutation: PyTorch [i, f, g, o] -> [i, f, o, g].
    perm = np.concatenate([np.arange(0, 2 * H), np.arange(3 * H, 4 * H),
                           np.arange(2 * H, 3 * H)])
    w_ih_p = w_ih[perm]
    w_hh_p = w_hh[perm]
    b = (b_ih + b_hh)[perm].reshape(1, 4 * H).astype(jnp.float32)

    if in_pad != in_dim:                       # only layer 0 with tiny I
        w_ih_p = jnp.pad(w_ih_p, ((0, 0), (0, in_pad - in_dim)))
        x3 = jnp.pad(x3, ((0, 0), (0, 0), (0, in_pad - in_dim)))

    wih_t = jnp.asarray(w_ih_p.T, jnp.bfloat16)   # (I_pad, 4H), off critical path
    whh_t = jnp.asarray(w_hh_p.T, jnp.float32)    # (H, 4H), f32 recurrence

    # Live VMEM estimate -> scoped limit (v5e default is only 16 MiB).
    vmem_need = (2 * rows * in_pad * 4          # x chunk, double-buffered
                 + 2 * rows * H * 4             # out chunk, double-buffered
                 + rows * 4 * H * 4             # hoisted gate projection
                 + in_pad * 4 * H * 2           # W_ih^T (bf16, single buffer)
                 + H * 4 * H * 4                # W_hh^T (f32, single buffer)
                 + 8 * b_tile * H * 4 + 8 * 4 * H * 4)
    vmem_limit = int(min(max(2 * vmem_need + (1 << 20), 16 << 20), 48 << 20))

    kernel = functools.partial(
        _lstm_layer_kernel, hidden=H, t_chunk=t_chunk, b_tile=b_tile,
        seq_len=seq_len, masked=(n_chunks * t_chunk > seq_len))

    out3, cN3 = pl.pallas_call(
        kernel,
        out_shape=(
            jax.ShapeDtypeStruct((nbt, n_chunks * rows, H), jnp.float32),
            jax.ShapeDtypeStruct((nbt, b_tile, H), jnp.float32),
        ),
        grid_spec=pltpu.PrefetchScalarGridSpec(
            num_scalar_prefetch=0,
            grid=(nbt, n_chunks),                 # (parallel batch, serial time)
            in_specs=[
                pl.BlockSpec((None, rows, in_pad), lambda j, n: (j, n, 0)),
                pl.BlockSpec(memory_space=pl.ANY),   # W_ih^T  (copied once)
                pl.BlockSpec(memory_space=pl.ANY),   # W_hh^T  (copied once)
                pl.BlockSpec((1, 4 * H), lambda j, n: (0, 0)),
                pl.BlockSpec((None, b_tile, H), lambda j, n: (j, 0, 0)),
                pl.BlockSpec((None, b_tile, H), lambda j, n: (j, 0, 0)),
            ],
            out_specs=[
                pl.BlockSpec((None, rows, H), lambda j, n: (j, n, 0)),
                pl.BlockSpec((None, b_tile, H), lambda j, n: (j, 0, 0)),
            ],
            scratch_shapes=[
                pltpu.VMEM((b_tile, H), jnp.float32),        # h carry
                pltpu.VMEM((b_tile, H), jnp.float32),        # c carry
                pltpu.VMEM((rows, 4 * H), jnp.float32),      # hoisted x-proj
                pltpu.VMEM((in_pad, 4 * H), jnp.bfloat16),   # resident W_ih^T
                pltpu.VMEM((H, 4 * H), jnp.float32),         # resident W_hh^T
                pltpu.SemaphoreType.DMA((2,)),
            ]),
        compiler_params=pltpu.CompilerParams(
            dimension_semantics=("parallel", "arbitrary"),
            vmem_limit_bytes=vmem_limit),
    )(x3, wih_t, whh_t, b, h0t, c0t)
    return out3, cN3


def lstm_forward(x, params, h0, c0):
    """Multi-layer LSTM; returns (out, out_h, out_c) like the PyTorch module."""
    S, B, _ = x.shape
    num_layers, _, H = h0.shape
    B_pad, b_tile, _ = _pick_batch_tiles(B)
    T, nc, S_pad = _pick_time_chunk(S, b_tile)

    # Pad/flatten once; inter-layer activations stay in this layout (no HBM
    # round-trip re-padding between layers).
    layer_in = _to_tiled_rows(x, S_pad, B_pad, b_tile)
    hs, cs = [], []
    for l in range(num_layers):
        w_ih, w_hh, b_ih, b_hh = params[l]
        h0t = _pad_state(h0[l], B_pad, b_tile)
        c0t = _pad_state(c0[l], B_pad, b_tile)
        out3, cN3 = _lstm_layer_pallas(layer_in, w_ih, w_hh, b_ih, b_hh,
                                       h0t, c0t, seq_len=S, t_chunk=T,
                                       n_chunks=nc, b_tile=b_tile)
        hN = out3[:, (S - 1) * b_tile:S * b_tile, :].reshape(B_pad, H)[:B]
        cN = cN3.reshape(B_pad, H)[:B]
        hs.append(hN)
        cs.append(cN)
        layer_in = out3
    out = _from_tiled_rows(layer_in, S, B, S_pad, b_tile)
    return out, jnp.stack(hs, axis=0), jnp.stack(cs, axis=0)


# ----------------------------- pure-JAX reference -----------------------------
def _lstm_layer_ref(x, w_ih, w_hh, b_ih, b_hh, h0, c0):
    H = w_hh.shape[1]
    b = b_ih + b_hh

    def step(carry, x_t):
        h, c = carry
        gates = x_t @ w_ih.T + h @ w_hh.T + b
        i_g = jax.nn.sigmoid(gates[:, 0 * H:1 * H])
        f_g = jax.nn.sigmoid(gates[:, 1 * H:2 * H])
        g_g = jnp.tanh(gates[:, 2 * H:3 * H])
        o_g = jax.nn.sigmoid(gates[:, 3 * H:4 * H])
        c_new = f_g * c + i_g * g_g
        h_new = o_g * jnp.tanh(c_new)
        return (h_new, c_new), h_new

    (hN, cN), out = jax.lax.scan(step, (h0, c0), x)
    return out, hN, cN


def lstm_forward_ref(x, params, h0, c0):
    layer_in = x
    hs, cs = [], []
    for l in range(h0.shape[0]):
        layer_in, hN, cN = _lstm_layer_ref(layer_in, *params[l], h0[l], c0[l])
        hs.append(hN)
        cs.append(cN)
    return layer_in, jnp.stack(hs, 0), jnp.stack(cs, 0)


# ------------------------------------ main ------------------------------------
if __name__ == "__main__":
    input_size = 4
    hidden_size = 32
    num_layers = 2
    seq_len = 8        # "timesteps"
    batch = 2

    key = jax.random.PRNGKey(0)
    keys = jax.random.split(key, 4 * num_layers + 3)

    # Deterministic parameter init mimicking PyTorch's U(-1/sqrt(H), 1/sqrt(H)).
    stdv = 1.0 / math.sqrt(hidden_size)
    params = []
    k_idx = 0
    for l in range(num_layers):
        in_sz = input_size if l == 0 else hidden_size
        w_ih = jax.random.uniform(keys[k_idx + 0], (4 * hidden_size, in_sz),
                                  jnp.float32, -stdv, stdv)
        w_hh = jax.random.uniform(keys[k_idx + 1], (4 * hidden_size, hidden_size),
                                  jnp.float32, -stdv, stdv)
        b_ih = jax.random.uniform(keys[k_idx + 2], (4 * hidden_size,),
                                  jnp.float32, -stdv, stdv)
        b_hh = jax.random.uniform(keys[k_idx + 3], (4 * hidden_size,),
                                  jnp.float32, -stdv, stdv)
        params.append((w_ih, w_hh, b_ih, b_hh))
        k_idx += 4

    # Inputs. x: (seq, batch, input_size) — batch_first=False layout.
    x = jax.random.normal(keys[k_idx + 0], (seq_len, batch, input_size),
                          jnp.float32)
    # The PyTorch module draws h0/c0 with torch.rand each call; drawn here
    # deterministically from the same PRNG (uniform [0, 1)).
    h0 = jax.random.uniform(keys[k_idx + 1], (num_layers, batch, hidden_size),
                            jnp.float32)
    c0 = jax.random.uniform(keys[k_idx + 2], (num_layers, batch, hidden_size),
                            jnp.float32)

    out, out_h, out_c = lstm_forward(x, params, h0, c0)
    jax.block_until_ready((out, out_h, out_c))

    # Sanity-check against a pure-JAX f32 reference. Only the (non-recurrent)
    # input projection uses bf16, so tolerance can be tight.
    out_r, out_h_r, out_c_r = lstm_forward_ref(x, params, h0, c0)
    assert out.shape == (seq_len, batch, hidden_size)
    assert out_h.shape == (num_layers, batch, hidden_size)
    assert out_c.shape == (num_layers, batch, hidden_size)
    assert jnp.allclose(out, out_r, atol=2e-2, rtol=2e-2)
    assert jnp.allclose(out_h, out_h_r, atol=2e-2, rtol=2e-2)
    assert jnp.allclose(out_c, out_c_r, atol=2e-2, rtol=2e-2)

    print("KERNEL_OK")
</pallas_src>

<mosaic_0001>
module attributes {stable_mosaic.version = 11 : i64} {
  func.func @_lstm_layer_kernel(%arg0: i32, %arg1: i32, %arg2: memref<1x64x8xf32, #tpu.memory_space<vmem>>, %arg3: memref<8x128xbf16, #tpu.memory_space<any>>, %arg4: memref<32x128xf32, #tpu.memory_space<any>>, %arg5: memref<1x128xf32, #tpu.memory_space<vmem>>, %arg6: memref<1x8x32xf32, #tpu.memory_space<vmem>>, %arg7: memref<1x8x32xf32, #tpu.memory_space<vmem>>, %arg8: memref<1x64x32xf32, #tpu.memory_space<vmem>>, %arg9: memref<1x8x32xf32, #tpu.memory_space<vmem>>, %arg10: memref<8x32xf32, #tpu.memory_space<vmem>>, %arg11: memref<8x32xf32, #tpu.memory_space<vmem>>, %arg12: memref<64x128xf32, #tpu.memory_space<vmem>>, %arg13: memref<8x128xbf16, #tpu.memory_space<vmem>>, %arg14: memref<32x128xf32, #tpu.memory_space<vmem>>, %arg15: memref<2x!tpu.dma_semaphore, #tpu.memory_space<semaphore_mem>>) attributes {dimension_semantics = [#tpu.dimension_semantics<parallel>, #tpu.dimension_semantics<arbitrary>], iteration_bounds = array<i64: 1, 1>, scalar_prefetch = 0 : i64, scratch_operands = 6 : i64, tpu.core_type = #tpu.core_type<tc>, window_params = [{transform_indices = @transform_0, window_bounds = array<i64: 1, 64, 8>}, {}, {}, {pipeline_mode = #tpu.pipeline_mode<synchronous>, transform_indices = @transform_3, window_bounds = array<i64: 1, 128>}, {transform_indices = @transform_4, window_bounds = array<i64: 1, 8, 32>}, {transform_indices = @transform_5, window_bounds = array<i64: 1, 8, 32>}, {transform_indices = @transform_6, window_bounds = array<i64: 1, 64, 32>}, {transform_indices = @transform_7, window_bounds = array<i64: 1, 8, 32>}]} {
    %c0_i32 = arith.constant 0 : i32
    %0 = arith.cmpi eq, %arg1, %c0_i32 : i32
    %1 = arith.extui %0 : i1 to i32
    %c0_i32_0 = arith.constant 0 : i32
    %2 = arith.cmpi ne, %1, %c0_i32_0 : i32
    scf.if %2 {
      %c0_i32_70 = arith.constant 0 : i32
      %228 = tpu.memref_slice %arg15[%c0_i32_70] : memref<2x!tpu.dma_semaphore, #tpu.memory_space<semaphore_mem>> -> memref<1x!tpu.dma_semaphore, #tpu.memory_space<semaphore_mem>>
      %229 = tpu.memref_squeeze %228 : memref<1x!tpu.dma_semaphore, #tpu.memory_space<semaphore_mem>> -> memref<!tpu.dma_semaphore, #tpu.memory_space<semaphore_mem>>
      tpu.enqueue_dma source(%arg3 : memref<8x128xbf16, #tpu.memory_space<any>>) target(%arg13 : memref<8x128xbf16, #tpu.memory_space<vmem>>) target_semaphore(%229 : memref<!tpu.dma_semaphore, #tpu.memory_space<semaphore_mem>>)
      %c1_i32_71 = arith.constant 1 : i32
      %230 = tpu.memref_slice %arg15[%c1_i32_71] : memref<2x!tpu.dma_semaphore, #tpu.memory_space<semaphore_mem>> -> memref<1x!tpu.dma_semaphore, #tpu.memory_space<semaphore_mem>>
      %231 = tpu.memref_squeeze %230 : memref<1x!tpu.dma_semaphore, #tpu.memory_space<semaphore_mem>> -> memref<!tpu.dma_semaphore, #tpu.memory_space<semaphore_mem>>
      tpu.enqueue_dma source(%arg4 : memref<32x128xf32, #tpu.memory_space<any>>) target(%arg14 : memref<32x128xf32, #tpu.memory_space<vmem>>) target_semaphore(%231 : memref<!tpu.dma_semaphore, #tpu.memory_space<semaphore_mem>>)
      %c0_i32_72 = arith.constant 0 : i32
      %232 = tpu.memref_slice %arg15[%c0_i32_72] : memref<2x!tpu.dma_semaphore, #tpu.memory_space<semaphore_mem>> -> memref<1x!tpu.dma_semaphore, #tpu.memory_space<semaphore_mem>>
      %233 = tpu.memref_squeeze %232 : memref<1x!tpu.dma_semaphore, #tpu.memory_space<semaphore_mem>> -> memref<!tpu.dma_semaphore, #tpu.memory_space<semaphore_mem>>
      tpu.wait_dma2 semaphore(%233 : memref<!tpu.dma_semaphore, #tpu.memory_space<semaphore_mem>>) src(%arg3 : memref<8x128xbf16, #tpu.memory_space<any>>) dst(%arg13 : memref<8x128xbf16, #tpu.memory_space<vmem>>)
      %c1_i32_73 = arith.constant 1 : i32
      %234 = tpu.memref_slice %arg15[%c1_i32_73] : memref<2x!tpu.dma_semaphore, #tpu.memory_space<semaphore_mem>> -> memref<1x!tpu.dma_semaphore, #tpu.memory_space<semaphore_mem>>
      %235 = tpu.memref_squeeze %234 : memref<1x!tpu.dma_semaphore, #tpu.memory_space<semaphore_mem>> -> memref<!tpu.dma_semaphore, #tpu.memory_space<semaphore_mem>>
      tpu.wait_dma2 semaphore(%235 : memref<!tpu.dma_semaphore, #tpu.memory_space<semaphore_mem>>) src(%arg4 : memref<32x128xf32, #tpu.memory_space<any>>) dst(%arg14 : memref<32x128xf32, #tpu.memory_space<vmem>>)
      %c0_74 = arith.constant 0 : index
      %c0_75 = arith.constant 0 : index
      %c0_76 = arith.constant 0 : index
      %236 = vector.load %arg6[%c0_74, %c0_75, %c0_76] : memref<1x8x32xf32, #tpu.memory_space<vmem>>, vector<1x8x32xf32>
      %237 = vector.shape_cast %236 : vector<1x8x32xf32> to vector<8x32xf32>
      %c0_77 = arith.constant 0 : index
      %c0_78 = arith.constant 0 : index
      %238 = vector.load %arg10[%c0_77, %c0_78] : memref<8x32xf32, #tpu.memory_space<vmem>>, vector<8x32xf32>
      tpu.vector_store %arg10[%c0_77, %c0_78], %237 {strides = array<i32>} : memref<8x32xf32, #tpu.memory_space<vmem>>, vector<8x32xf32>,
      %c0_79 = arith.constant 0 : index
      %c0_80 = arith.constant 0 : index
      %c0_81 = arith.constant 0 : index
      %239 = vector.load %arg7[%c0_79, %c0_80, %c0_81] : memref<1x8x32xf32, #tpu.memory_space<vmem>>, vector<1x8x32xf32>
      %240 = vector.shape_cast %239 : vector<1x8x32xf32> to vector<8x32xf32>
      %c0_82 = arith.constant 0 : index
      %c0_83 = arith.constant 0 : index
      %241 = vector.load %arg11[%c0_82, %c0_83] : memref<8x32xf32, #tpu.memory_space<vmem>>, vector<8x32xf32>
      tpu.vector_store %arg11[%c0_82, %c0_83], %240 {strides = array<i32>} : memref<8x32xf32, #tpu.memory_space<vmem>>, vector<8x32xf32>,
    } else {
    }
    %c0 = arith.constant 0 : index
    %c0_1 = arith.constant 0 : index
    %c0_2 = arith.constant 0 : index
    %3 = vector.load %arg2[%c0, %c0_1, %c0_2] : memref<1x64x8xf32, #tpu.memory_space<vmem>>, vector<1x64x8xf32>
    %4 = vector.shape_cast %3 : vector<1x64x8xf32> to vector<64x8xf32>
    %5 = arith.truncf %4 : vector<64x8xf32> to vector<64x8xbf16>
    %c0_3 = arith.constant 0 : index
    %c0_4 = arith.constant 0 : index
    %6 = vector.load %arg13[%c0_3, %c0_4] : memref<8x128xbf16, #tpu.memory_space<vmem>>, vector<8x128xbf16>
    %cst = arith.constant dense<0.000000e+00> : vector<64x128xf32>
    %7 = tpu.matmul %5, %6, %cst {dimension_numbers = #tpu.dot_dimension_numbers<[1], [0], [0], [1], [0, 0, 1, 1], [], []>} : vector<64x8xbf16>, vector<8x128xbf16>, vector<64x128xf32> -> vector<64x128xf32>
    %c0_5 = arith.constant 0 : index
    %c0_6 = arith.constant 0 : index
    %8 = vector.load %arg5[%c0_5, %c0_6] : memref<1x128xf32, #tpu.memory_space<vmem>>, vector<1x128xf32>
    %9 = vector.broadcast %8 : vector<1x128xf32> to vector<64x128xf32>
    %10 = arith.addf %7, %9 : vector<64x128xf32>
    %c0_7 = arith.constant 0 : index
    %c0_8 = arith.constant 0 : index
    %11 = vector.load %arg12[%c0_7, %c0_8] : memref<64x128xf32, #tpu.memory_space<vmem>>, vector<64x128xf32>
    tpu.vector_store %arg12[%c0_7, %c0_8], %10 {strides = array<i32>} : memref<64x128xf32, #tpu.memory_space<vmem>>, vector<64x128xf32>,
    %c0_9 = arith.constant 0 : index
    %c0_10 = arith.constant 0 : index
    %12 = vector.load %arg14[%c0_9, %c0_10] : memref<32x128xf32, #tpu.memory_space<vmem>>, vector<32x128xf32>
    %c0_11 = arith.constant 0 : index
    %c0_12 = arith.constant 0 : index
    %13 = vector.load %arg10[%c0_11, %c0_12] : memref<8x32xf32, #tpu.memory_space<vmem>>, vector<8x32xf32>
    %c0_13 = arith.constant 0 : index
    %c0_14 = arith.constant 0 : index
    %14 = vector.load %arg11[%c0_13, %c0_14] : memref<8x32xf32, #tpu.memory_space<vmem>>, vector<8x32xf32>
    %c0_i32_15 = arith.constant 0 : i32
    %c8_i32 = arith.constant 8 : i32
    %15 = arith.muli %c0_i32_15, %c8_i32 : i32
    %16 = tpu.assume_multiple %15, 8 : i32
    %17 = arith.index_cast %16 : i32 to index
    %c0_16 = arith.constant 0 : index
    %18 = vector.load %arg12[%17, %c0_16] : memref<64x128xf32, #tpu.memory_space<vmem>>, vector<8x128xf32>
    %cst_17 = arith.constant dense<0.000000e+00> : vector<8x128xf32>
    %19 = tpu.matmul %13, %12, %cst_17 {dimension_numbers = #tpu.dot_dimension_numbers<[1], [0], [0], [1], [0, 0, 1, 1], [], []>} : vector<8x32xf32>, vector<32x128xf32>, vector<8x128xf32> -> vector<8x128xf32>
    %20 = arith.addf %18, %19 : vector<8x128xf32>
    %21 = vector.extract_strided_slice %20 {offsets = [0, 0], sizes = [8, 96], strides = [1, 1]} : vector<8x128xf32> to vector<8x96xf32>
    %22 = arith.negf %21 : vector<8x96xf32>
    %23 = math.exp %22 : vector<8x96xf32>
    %cst_18 = arith.constant 1.000000e+00 : f32
    %24 = vector.broadcast %cst_18 : f32 to vector<8x96xf32>
    %25 = arith.addf %24, %23 : vector<8x96xf32>
    %26 = arith.divf %24, %25 : vector<8x96xf32>
    %27 = vector.extract_strided_slice %26 {offsets = [0, 0], sizes = [8, 32], strides = [1, 1]} : vector<8x96xf32> to vector<8x32xf32>
    %28 = vector.extract_strided_slice %26 {offsets = [0, 32], sizes = [8, 32], strides = [1, 1]} : vector<8x96xf32> to vector<8x32xf32>
    %29 = vector.extract_strided_slice %26 {offsets = [0, 64], sizes = [8, 32], strides = [1, 1]} : vector<8x96xf32> to vector<8x32xf32>
    %30 = vector.extract_strided_slice %20 {offsets = [0, 96], sizes = [8, 32], strides = [1, 1]} : vector<8x128xf32> to vector<8x32xf32>
    %31 = math.tanh %30 : vector<8x32xf32>
    %32 = arith.mulf %28, %14 : vector<8x32xf32>
    %33 = arith.mulf %27, %31 : vector<8x32xf32>
    %34 = arith.addf %32, %33 : vector<8x32xf32>
    %35 = math.tanh %34 : vector<8x32xf32>
    %36 = arith.mulf %29, %35 : vector<8x32xf32>
    %c0_19 = arith.constant 0 : index
    %37 = arith.index_cast %16 : i32 to index
    %c0_20 = arith.constant 0 : index
    %38 = vector.load %arg8[%c0_19, %37, %c0_20] : memref<1x64x32xf32, #tpu.memory_space<vmem>>, vector<1x8x32xf32>
    %39 = vector.shape_cast %38 : vector<1x8x32xf32> to vector<8x32xf32>
    %40 = vector.shape_cast %36 : vector<8x32xf32> to vector<1x8x32xf32>
    tpu.vector_store %arg8[%c0_19, %37, %c0_20], %40 {strides = array<i32>} : memref<1x64x32xf32, #tpu.memory_space<vmem>>, vector<1x8x32xf32>,
    %c1_i32 = arith.constant 1 : i32
    %c8_i32_21 = arith.constant 8 : i32
    %41 = arith.muli %c1_i32, %c8_i32_21 : i32
    %42 = tpu.assume_multiple %41, 8 : i32
    %43 = arith.index_cast %42 : i32 to index
    %c0_22 = arith.constant 0 : index
    %44 = vector.load %arg12[%43, %c0_22] : memref<64x128xf32, #tpu.memory_space<vmem>>, vector<8x128xf32>
    %cst_23 = arith.constant dense<0.000000e+00> : vector<8x128xf32>
    %45 = tpu.matmul %36, %12, %cst_23 {dimension_numbers = #tpu.dot_dimension_numbers<[1], [0], [0], [1], [0, 0, 1, 1], [], []>} : vector<8x32xf32>, vector<32x128xf32>, vector<8x128xf32> -> vector<8x128xf32>
    %46 = arith.addf %44, %45 : vector<8x128xf32>
    %47 = vector.extract_strided_slice %46 {offsets = [0, 0], sizes = [8, 96], strides = [1, 1]} : vector<8x128xf32> to vector<8x96xf32>
    %48 = arith.negf %47 : vector<8x96xf32>
    %49 = math.exp %48 : vector<8x96xf32>
    %cst_24 = arith.constant 1.000000e+00 : f32
    %50 = vector.broadcast %cst_24 : f32 to vector<8x96xf32>
    %51 = arith.addf %50, %49 : vector<8x96xf32>
    %52 = arith.divf %50, %51 : vector<8x96xf32>
    %53 = vector.extract_strided_slice %52 {offsets = [0, 0], sizes = [8, 32], strides = [1, 1]} : vector<8x96xf32> to vector<8x32xf32>
    %54 = vector.extract_strided_slice %52 {offsets = [0, 32], sizes = [8, 32], strides = [1, 1]} : vector<8x96xf32> to vector<8x32xf32>
    %55 = vector.extract_strided_slice %52 {offsets = [0, 64], sizes = [8, 32], strides = [1, 1]} : vector<8x96xf32> to vector<8x32xf32>
    %56 = vector.extract_strided_slice %46 {offsets = [0, 96], sizes = [8, 32], strides = [1, 1]} : vector<8x128xf32> to vector<8x32xf32>
    %57 = math.tanh %56 : vector<8x32xf32>
    %58 = arith.mulf %54, %34 : vector<8x32xf32>
    %59 = arith.mulf %53, %57 : vector<8x32xf32>
    %60 = arith.addf %58, %59 : vector<8x32xf32>
    %61 = math.tanh %60 : vector<8x32xf32>
    %62 = arith.mulf %55, %61 : vector<8x32xf32>
    %c0_25 = arith.constant 0 : index
    %63 = arith.index_cast %42 : i32 to index
    %c0_26 = arith.constant 0 : index
    %64 = vector.load %arg8[%c0_25, %63, %c0_26] : memref<1x64x32xf32, #tpu.memory_space<vmem>>, vector<1x8x32xf32>
    %65 = vector.shape_cast %64 : vector<1x8x32xf32> to vector<8x32xf32>
    %66 = vector.shape_cast %62 : vector<8x32xf32> to vector<1x8x32xf32>
    tpu.vector_store %arg8[%c0_25, %63, %c0_26], %66 {strides = array<i32>} : memref<1x64x32xf32, #tpu.memory_space<vmem>>, vector<1x8x32xf32>,
    %c2_i32 = arith.constant 2 : i32
    %c8_i32_27 = arith.constant 8 : i32
    %67 = arith.muli %c2_i32, %c8_i32_27 : i32
    %68 = tpu.assume_multiple %67, 8 : i32
    %69 = arith.index_cast %68 : i32 to index
    %c0_28 = arith.constant 0 : index
    %70 = vector.load %arg12[%69, %c0_28] : memref<64x128xf32, #tpu.memory_space<vmem>>, vector<8x128xf32>
    %cst_29 = arith.constant dense<0.000000e+00> : vector<8x128xf32>
    %71 = tpu.matmul %62, %12, %cst_29 {dimension_numbers = #tpu.dot_dimension_numbers<[1], [0], [0], [1], [0, 0, 1, 1], [], []>} : vector<8x32xf32>, vector<32x128xf32>, vector<8x128xf32> -> vector<8x128xf32>
    %72 = arith.addf %70, %71 : vector<8x128xf32>
    %73 = vector.extract_strided_slice %72 {offsets = [0, 0], sizes = [8, 96], strides = [1, 1]} : vector<8x128xf32> to vector<8x96xf32>
    %74 = arith.negf %73 : vector<8x96xf32>
    %75 = math.exp %74 : vector<8x96xf32>
    %cst_30 = arith.constant 1.000000e+00 : f32
    %76 = vector.broadcast %cst_30 : f32 to vector<8x96xf32>
    %77 = arith.addf %76, %75 : vector<8x96xf32>
    %78 = arith.divf %76, %77 : vector<8x96xf32>
    %79 = vector.extract_strided_slice %78 {offsets = [0, 0], sizes = [8, 32], strides = [1, 1]} : vector<8x96xf32> to vector<8x32xf32>
    %80 = vector.extract_strided_slice %78 {offsets = [0, 32], sizes = [8, 32], strides = [1, 1]} : vector<8x96xf32> to vector<8x32xf32>
    %81 = vector.extract_strided_slice %78 {offsets = [0, 64], sizes = [8, 32], strides = [1, 1]} : vector<8x96xf32> to vector<8x32xf32>
    %82 = vector.extract_strided_slice %72 {offsets = [0, 96], sizes = [8, 32], strides = [1, 1]} : vector<8x128xf32> to vector<8x32xf32>
    %83 = math.tanh %82 : vector<8x32xf32>
    %84 = arith.mulf %80, %60 : vector<8x32xf32>
    %85 = arith.mulf %79, %83 : vector<8x32xf32>
    %86 = arith.addf %84, %85 : vector<8x32xf32>
    %87 = math.tanh %86 : vector<8x32xf32>
    %88 = arith.mulf %81, %87 : vector<8x32xf32>
    %c0_31 = arith.constant 0 : index
    %89 = arith.index_cast %68 : i32 to index
    %c0_32 = arith.constant 0 : index
    %90 = vector.load %arg8[%c0_31, %89, %c0_32] : memref<1x64x32xf32, #tpu.memory_space<vmem>>, vector<1x8x32xf32>
    %91 = vector.shape_cast %90 : vector<1x8x32xf32> to vector<8x32xf32>
    %92 = vector.shape_cast %88 : vector<8x32xf32> to vector<1x8x32xf32>
    tpu.vector_store %arg8[%c0_31, %89, %c0_32], %92 {strides = array<i32>} : memref<1x64x32xf32, #tpu.memory_space<vmem>>, vector<1x8x32xf32>,
    %c3_i32 = arith.constant 3 : i32
    %c8_i32_33 = arith.constant 8 : i32
    %93 = arith.muli %c3_i32, %c8_i32_33 : i32
    %94 = tpu.assume_multiple %93, 8 : i32
    %95 = arith.index_cast %94 : i32 to index
    %c0_34 = arith.constant 0 : index
    %96 = vector.load %arg12[%95, %c0_34] : memref<64x128xf32, #tpu.memory_space<vmem>>, vector<8x128xf32>
    %cst_35 = arith.constant dense<0.000000e+00> : vector<8x128xf32>
    %97 = tpu.matmul %88, %12, %cst_35 {dimension_numbers = #tpu.dot_dimension_numbers<[1], [0], [0], [1], [0, 0, 1, 1], [], []>} : vector<8x32xf32>, vector<32x128xf32>, vector<8x128xf32> -> vector<8x128xf32>
    %98 = arith.addf %96, %97 : vector<8x128xf32>
    %99 = vector.extract_strided_slice %98 {offsets = [0, 0], sizes = [8, 96], strides = [1, 1]} : vector<8x128xf32> to vector<8x96xf32>
    %100 = arith.negf %99 : vector<8x96xf32>
    %101 = math.exp %100 : vector<8x96xf32>
    %cst_36 = arith.constant 1.000000e+00 : f32
    %102 = vector.broadcast %cst_36 : f32 to vector<8x96xf32>
    %103 = arith.addf %102, %101 : vector<8x96xf32>
    %104 = arith.divf %102, %103 : vector<8x96xf32>
    %105 = vector.extract_strided_slice %104 {offsets = [0, 0], sizes = [8, 32], strides = [1, 1]} : vector<8x96xf32> to vector<8x32xf32>
    %106 = vector.extract_strided_slice %104 {offsets = [0, 32], sizes = [8, 32], strides = [1, 1]} : vector<8x96xf32> to vector<8x32xf32>
    %107 = vector.extract_strided_slice %104 {offsets = [0, 64], sizes = [8, 32], strides = [1, 1]} : vector<8x96xf32> to vector<8x32xf32>
    %108 = vector.extract_strided_slice %98 {offsets = [0, 96], sizes = [8, 32], strides = [1, 1]} : vector<8x128xf32> to vector<8x32xf32>
    %109 = math.tanh %108 : vector<8x32xf32>
    %110 = arith.mulf %106, %86 : vector<8x32xf32>
    %111 = arith.mulf %105, %109 : vector<8x32xf32>
    %112 = arith.addf %110, %111 : vector<8x32xf32>
    %113 = math.tanh %112 : vector<8x32xf32>
    %114 = arith.mulf %107, %113 : vector<8x32xf32>
    %c0_37 = arith.constant 0 : index
    %115 = arith.index_cast %94 : i32 to index
    %c0_38 = arith.constant 0 : index
    %116 = vector.load %arg8[%c0_37, %115, %c0_38] : memref<1x64x32xf32, #tpu.memory_space<vmem>>, vector<1x8x32xf32>
    %117 = vector.shape_cast %116 : vector<1x8x32xf32> to vector<8x32xf32>
    %118 = vector.shape_cast %114 : vector<8x32xf32> to vector<1x8x32xf32>
    tpu.vector_store %arg8[%c0_37, %115, %c0_38], %118 {strides = array<i32>} : memref<1x64x32xf32, #tpu.memory_space<vmem>>, vector<1x8x32xf32>,
    %c4_i32 = arith.constant 4 : i32
    %c8_i32_39 = arith.constant 8 : i32
    %119 = arith.muli %c4_i32, %c8_i32_39 : i32
    %120 = tpu.assume_multiple %119, 8 : i32
    %121 = arith.index_cast %120 : i32 to index
    %c0_40 = arith.constant 0 : index
    %122 = vector.load %arg12[%121, %c0_40] : memref<64x128xf32, #tpu.memory_space<vmem>>, vector<8x128xf32>
    %cst_41 = arith.constant dense<0.000000e+00> : vector<8x128xf32>
    %123 = tpu.matmul %114, %12, %cst_41 {dimension_numbers = #tpu.dot_dimension_numbers<[1], [0], [0], [1], [0, 0, 1, 1], [], []>} : vector<8x32xf32>, vector<32x128xf32>, vector<8x128xf32> -> vector<8x128xf32>
    %124 = arith.addf %122, %123 : vector<8x128xf32>
    %125 = vector.extract_strided_slice %124 {offsets = [0, 0], sizes = [8, 96], strides = [1, 1]} : vector<8x128xf32> to vector<8x96xf32>
    %126 = arith.negf %125 : vector<8x96xf32>
    %127 = math.exp %126 : vector<8x96xf32>
    %cst_42 = arith.constant 1.000000e+00 : f32
    %128 = vector.broadcast %cst_42 : f32 to vector<8x96xf32>
    %129 = arith.addf %128, %127 : vector<8x96xf32>
    %130 = arith.divf %128, %129 : vector<8x96xf32>
    %131 = vector.extract_strided_slice %130 {offsets = [0, 0], sizes = [8, 32], strides = [1, 1]} : vector<8x96xf32> to vector<8x32xf32>
    %132 = vector.extract_strided_slice %130 {offsets = [0, 32], sizes = [8, 32], strides = [1, 1]} : vector<8x96xf32> to vector<8x32xf32>
    %133 = vector.extract_strided_slice %130 {offsets = [0, 64], sizes = [8, 32], strides = [1, 1]} : vector<8x96xf32> to vector<8x32xf32>
    %134 = vector.extract_strided_slice %124 {offsets = [0, 96], sizes = [8, 32], strides = [1, 1]} : vector<8x128xf32> to vector<8x32xf32>
    %135 = math.tanh %134 : vector<8x32xf32>
    %136 = arith.mulf %132, %112 : vector<8x32xf32>
    %137 = arith.mulf %131, %135 : vector<8x32xf32>
    %138 = arith.addf %136, %137 : vector<8x32xf32>
    %139 = math.tanh %138 : vector<8x32xf32>
    %140 = arith.mulf %133, %139 : vector<8x32xf32>
    %c0_43 = arith.constant 0 : index
    %141 = arith.index_cast %120 : i32 to index
    %c0_44 = arith.constant 0 : index
    %142 = vector.load %arg8[%c0_43, %141, %c0_44] : memref<1x64x32xf32, #tpu.memory_space<vmem>>, vector<1x8x32xf32>
    %143 = vector.shape_cast %142 : vector<1x8x32xf32> to vector<8x32xf32>
    %144 = vector.shape_cast %140 : vector<8x32xf32> to vector<1x8x32xf32>
    tpu.vector_store %arg8[%c0_43, %141, %c0_44], %144 {strides = array<i32>} : memref<1x64x32xf32, #tpu.memory_space<vmem>>, vector<1x8x32xf32>,
    %c5_i32 = arith.constant 5 : i32
    %c8_i32_45 = arith.constant 8 : i32
    %145 = arith.muli %c5_i32, %c8_i32_45 : i32
    %146 = tpu.assume_multiple %145, 8 : i32
    %147 = arith.index_cast %146 : i32 to index
    %c0_46 = arith.constant 0 : index
    %148 = vector.load %arg12[%147, %c0_46] : memref<64x128xf32, #tpu.memory_space<vmem>>, vector<8x128xf32>
    %cst_47 = arith.constant dense<0.000000e+00> : vector<8x128xf32>
    %149 = tpu.matmul %140, %12, %cst_47 {dimension_numbers = #tpu.dot_dimension_numbers<[1], [0], [0], [1], [0, 0, 1, 1], [], []>} : vector<8x32xf32>, vector<32x128xf32>, vector<8x128xf32> -> vector<8x128xf32>
    %150 = arith.addf %148, %149 : vector<8x128xf32>
    %151 = vector.extract_strided_slice %150 {offsets = [0, 0], sizes = [8, 96], strides = [1, 1]} : vector<8x128xf32> to vector<8x96xf32>
    %152 = arith.negf %151 : vector<8x96xf32>
    %153 = math.exp %152 : vector<8x96xf32>
    %cst_48 = arith.constant 1.000000e+00 : f32
    %154 = vector.broadcast %cst_48 : f32 to vector<8x96xf32>
    %155 = arith.addf %154, %153 : vector<8x96xf32>
    %156 = arith.divf %154, %155 : vector<8x96xf32>
    %157 = vector.extract_strided_slice %156 {offsets = [0, 0], sizes = [8, 32], strides = [1, 1]} : vector<8x96xf32> to vector<8x32xf32>
    %158 = vector.extract_strided_slice %156 {offsets = [0, 32], sizes = [8, 32], strides = [1, 1]} : vector<8x96xf32> to vector<8x32xf32>
    %159 = vector.extract_strided_slice %156 {offsets = [0, 64], sizes = [8, 32], strides = [1, 1]} : vector<8x96xf32> to vector<8x32xf32>
    %160 = vector.extract_strided_slice %150 {offsets = [0, 96], sizes = [8, 32], strides = [1, 1]} : vector<8x128xf32> to vector<8x32xf32>
    %161 = math.tanh %160 : vector<8x32xf32>
    %162 = arith.mulf %158, %138 : vector<8x32xf32>
    %163 = arith.mulf %157, %161 : vector<8x32xf32>
    %164 = arith.addf %162, %163 : vector<8x32xf32>
    %165 = math.tanh %164 : vector<8x32xf32>
    %166 = arith.mulf %159, %165 : vector<8x32xf32>
    %c0_49 = arith.constant 0 : index
    %167 = arith.index_cast %146 : i32 to index
    %c0_50 = arith.constant 0 : index
    %168 = vector.load %arg8[%c0_49, %167, %c0_50] : memref<1x64x32xf32, #tpu.memory_space<vmem>>, vector<1x8x32xf32>
    %169 = vector.shape_cast %168 : vector<1x8x32xf32> to vector<8x32xf32>
    %170 = vector.shape_cast %166 : vector<8x32xf32> to vector<1x8x32xf32>
    tpu.vector_store %arg8[%c0_49, %167, %c0_50], %170 {strides = array<i32>} : memref<1x64x32xf32, #tpu.memory_space<vmem>>, vector<1x8x32xf32>,
    %c6_i32 = arith.constant 6 : i32
    %c8_i32_51 = arith.constant 8 : i32
    %171 = arith.muli %c6_i32, %c8_i32_51 : i32
    %172 = tpu.assume_multiple %171, 8 : i32
    %173 = arith.index_cast %172 : i32 to index
    %c0_52 = arith.constant 0 : index
    %174 = vector.load %arg12[%173, %c0_52] : memref<64x128xf32, #tpu.memory_space<vmem>>, vector<8x128xf32>
    %cst_53 = arith.constant dense<0.000000e+00> : vector<8x128xf32>
    %175 = tpu.matmul %166, %12, %cst_53 {dimension_numbers = #tpu.dot_dimension_numbers<[1], [0], [0], [1], [0, 0, 1, 1], [], []>} : vector<8x32xf32>, vector<32x128xf32>, vector<8x128xf32> -> vector<8x128xf32>
    %176 = arith.addf %174, %175 : vector<8x128xf32>
    %177 = vector.extract_strided_slice %176 {offsets = [0, 0], sizes = [8, 96], strides = [1, 1]} : vector<8x128xf32> to vector<8x96xf32>
    %178 = arith.negf %177 : vector<8x96xf32>
    %179 = math.exp %178 : vector<8x96xf32>
    %cst_54 = arith.constant 1.000000e+00 : f32
    %180 = vector.broadcast %cst_54 : f32 to vector<8x96xf32>
    %181 = arith.addf %180, %179 : vector<8x96xf32>
    %182 = arith.divf %180, %181 : vector<8x96xf32>
    %183 = vector.extract_strided_slice %182 {offsets = [0, 0], sizes = [8, 32], strides = [1, 1]} : vector<8x96xf32> to vector<8x32xf32>
    %184 = vector.extract_strided_slice %182 {offsets = [0, 32], sizes = [8, 32], strides = [1, 1]} : vector<8x96xf32> to vector<8x32xf32>
    %185 = vector.extract_strided_slice %182 {offsets = [0, 64], sizes = [8, 32], strides = [1, 1]} : vector<8x96xf32> to vector<8x32xf32>
    %186 = vector.extract_strided_slice %176 {offsets = [0, 96], sizes = [8, 32], strides = [1, 1]} : vector<8x128xf32> to vector<8x32xf32>
    %187 = math.tanh %186 : vector<8x32xf32>
    %188 = arith.mulf %184, %164 : vector<8x32xf32>
    %189 = arith.mulf %183, %187 : vector<8x32xf32>
    %190 = arith.addf %188, %189 : vector<8x32xf32>
    %191 = math.tanh %190 : vector<8x32xf32>
    %192 = arith.mulf %185, %191 : vector<8x32xf32>
    %c0_55 = arith.constant 0 : index
    %193 = arith.index_cast %172 : i32 to index
    %c0_56 = arith.constant 0 : index
    %194 = vector.load %arg8[%c0_55, %193, %c0_56] : memref<1x64x32xf32, #tpu.memory_space<vmem>>, vector<1x8x32xf32>
    %195 = vector.shape_cast %194 : vector<1x8x32xf32> to vector<8x32xf32>
    %196 = vector.shape_cast %192 : vector<8x32xf32> to vector<1x8x32xf32>
    tpu.vector_store %arg8[%c0_55, %193, %c0_56], %196 {strides = array<i32>} : memref<1x64x32xf32, #tpu.memory_space<vmem>>, vector<1x8x32xf32>,
    %c7_i32 = arith.constant 7 : i32
    %c8_i32_57 = arith.constant 8 : i32
    %197 = arith.muli %c7_i32, %c8_i32_57 : i32
    %198 = tpu.assume_multiple %197, 8 : i32
    %199 = arith.index_cast %198 : i32 to index
    %c0_58 = arith.constant 0 : index
    %200 = vector.load %arg12[%199, %c0_58] : memref<64x128xf32, #tpu.memory_space<vmem>>, vector<8x128xf32>
    %cst_59 = arith.constant dense<0.000000e+00> : vector<8x128xf32>
    %201 = tpu.matmul %192, %12, %cst_59 {dimension_numbers = #tpu.dot_dimension_numbers<[1], [0], [0], [1], [0, 0, 1, 1], [], []>} : vector<8x32xf32>, vector<32x128xf32>, vector<8x128xf32> -> vector<8x128xf32>
    %202 = arith.addf %200, %201 : vector<8x128xf32>
    %203 = vector.extract_strided_slice %202 {offsets = [0, 0], sizes = [8, 96], strides = [1, 1]} : vector<8x128xf32> to vector<8x96xf32>
    %204 = arith.negf %203 : vector<8x96xf32>
    %205 = math.exp %204 : vector<8x96xf32>
    %cst_60 = arith.constant 1.000000e+00 : f32
    %206 = vector.broadcast %cst_60 : f32 to vector<8x96xf32>
    %207 = arith.addf %206, %205 : vector<8x96xf32>
    %208 = arith.divf %206, %207 : vector<8x96xf32>
    %209 = vector.extract_strided_slice %208 {offsets = [0, 0], sizes = [8, 32], strides = [1, 1]} : vector<8x96xf32> to vector<8x32xf32>
    %210 = vector.extract_strided_slice %208 {offsets = [0, 32], sizes = [8, 32], strides = [1, 1]} : vector<8x96xf32> to vector<8x32xf32>
    %211 = vector.extract_strided_slice %208 {offsets = [0, 64], sizes = [8, 32], strides = [1, 1]} : vector<8x96xf32> to vector<8x32xf32>
    %212 = vector.extract_strided_slice %202 {offsets = [0, 96], sizes = [8, 32], strides = [1, 1]} : vector<8x128xf32> to vector<8x32xf32>
    %213 = math.tanh %212 : vector<8x32xf32>
    %214 = arith.mulf %210, %190 : vector<8x32xf32>
    %215 = arith.mulf %209, %213 : vector<8x32xf32>
    %216 = arith.addf %214, %215 : vector<8x32xf32>
    %217 = math.tanh %216 : vector<8x32xf32>
    %218 = arith.mulf %211, %217 : vector<8x32xf32>
    %c0_61 = arith.constant 0 : index
    %219 = arith.index_cast %198 : i32 to index
    %c0_62 = arith.constant 0 : index
    %220 = vector.load %arg8[%c0_61, %219, %c0_62] : memref<1x64x32xf32, #tpu.memory_space<vmem>>, vector<1x8x32xf32>
    %221 = vector.shape_cast %220 : vector<1x8x32xf32> to vector<8x32xf32>
    %222 = vector.shape_cast %218 : vector<8x32xf32> to vector<1x8x32xf32>
    tpu.vector_store %arg8[%c0_61, %219, %c0_62], %222 {strides = array<i32>} : memref<1x64x32xf32, #tpu.memory_space<vmem>>, vector<1x8x32xf32>,
    %c8_i32_63 = arith.constant 8 : i32
    %c0_64 = arith.constant 0 : index
    %c0_65 = arith.constant 0 : index
    %223 = vector.load %arg10[%c0_64, %c0_65] : memref<8x32xf32, #tpu.memory_space<vmem>>, vector<8x32xf32>
    tpu.vector_store %arg10[%c0_64, %c0_65], %218 {strides = array<i32>} : memref<8x32xf32, #tpu.memory_space<vmem>>, vector<8x32xf32>,
    %c0_66 = arith.constant 0 : index
    %c0_67 = arith.constant 0 : index
    %224 = vector.load %arg11[%c0_66, %c0_67] : memref<8x32xf32, #tpu.memory_space<vmem>>, vector<8x32xf32>
    tpu.vector_store %arg11[%c0_66, %c0_67], %216 {strides = array<i32>} : memref<8x32xf32, #tpu.memory_space<vmem>>, vector<8x32xf32>,
    %c0_i32_68 = arith.constant 0 : i32
    %225 = arith.cmpi eq, %arg1, %c0_i32_68 : i32
    %226 = arith.extui %225 : i1 to i32
    %c0_i32_69 = arith.constant 0 : i32
    %227 = arith.cmpi ne, %226, %c0_i32_69 : i32
    scf.if %227 {
      %c0_70 = arith.constant 0 : index
      %c0_71 = arith.constant 0 : index
      %c0_72 = arith.constant 0 : index
      %228 = vector.load %arg9[%c0_70, %c0_71, %c0_72] : memref<1x8x32xf32, #tpu.memory_space<vmem>>, vector<1x8x32xf32>
      %229 = vector.shape_cast %228 : vector<1x8x32xf32> to vector<8x32xf32>
      %230 = vector.shape_cast %216 : vector<8x32xf32> to vector<1x8x32xf32>
      tpu.vector_store %arg9[%c0_70, %c0_71, %c0_72], %230 {strides = array<i32>} : memref<1x8x32xf32, #tpu.memory_space<vmem>>, vector<1x8x32xf32>,
    } else {
    }
    return
  }
  func.func @transform_0(%arg0: i32, %arg1: i32) -> (i32, i32, i32) {
    %c0_i32 = arith.constant 0 : i32
    %c0_i32_0 = arith.constant 0 : i32
    return %arg0, %arg1, %c0_i32 : i32, i32, i32
  }
  func.func @transform_3(%arg0: i32, %arg1: i32) -> (i32, i32) {
    %c0_i32 = arith.constant 0 : i32
    %c0_i32_0 = arith.constant 0 : i32
    %c0_i32_1 = arith.constant 0 : i32
    return %c0_i32, %c0_i32_0 : i32, i32
  }
  func.func @transform_4(%arg0: i32, %arg1: i32) -> (i32, i32, i32) {
    %c0_i32 = arith.constant 0 : i32
    %c0_i32_0 = arith.constant 0 : i32
    %c0_i32_1 = arith.constant 0 : i32
    return %arg0, %c0_i32, %c0_i32_0 : i32, i32, i32
  }
  func.func @transform_5(%arg0: i32, %arg1: i32) -> (i32, i32, i32) {
    %c0_i32 = arith.constant 0 : i32
    %c0_i32_0 = arith.constant 0 : i32
    %c0_i32_1 = arith.constant 0 : i32
    return %arg0, %c0_i32, %c0_i32_0 : i32, i32, i32
  }
  func.func @transform_6(%arg0: i32, %arg1: i32) -> (i32, i32, i32) {
    %c0_i32 = arith.constant 0 : i32
    %c0_i32_0 = arith.constant 0 : i32
    return %arg0, %arg1, %c0_i32 : i32, i32, i32
  }
  func.func @transform_7(%arg0: i32, %arg1: i32) -> (i32, i32, i32) {
    %c0_i32 = arith.constant 0 : i32
    %c0_i32_0 = arith.constant 0 : i32
    %c0_i32_1 = arith.constant 0 : i32
    return %arg0, %c0_i32, %c0_i32_0 : i32, i32, i32
  }
}

</mosaic_0001>

<llo_original>
// kernel: tpu_custom_call.1
$region0: #{tpu_custom_call.1}
  #allocation0 [shape = 'u32[]', space=smem, size = 0x4, offset = 0x4, fixed_abs, tag = 'smem constant byte address 0x4 - core index']
  #allocation1 [shape = 'u32[144,128]{1,0:T(1,128)}', space=vmem, size = 0x12000, scoped, tag = 'internal scratch']
  #allocation2 [shape = 'f32[8,32]{1,0:T(8,128)}', space=vmem, size = 0x1000, scoped, tag = 'scratch operand']
  #allocation3 [shape = 'f32[8,32]{1,0:T(8,128)}', space=vmem, size = 0x1000, scoped, tag = 'scratch operand']
  #allocation4 [shape = 'f32[64,128]{1,0:T(8,128)}', space=vmem, size = 0x8000, scoped, tag = 'scratch operand']
  #allocation5 [shape = 'bf16[8,128]{1,0:T(8,128)(2,1)}', space=vmem, size = 0x800, scoped, tag = 'scratch operand']
  #allocation6 [shape = 'f32[32,128]{1,0:T(8,128)}', space=vmem, size = 0x4000, scoped, tag = 'scratch operand']
  #allocation7 [shape = 's32[2]{0}', space=sflag, size = 0x8, scoped, tag = 'scratch operand']
  #allocation10 [shape = 's32[]', space=sflag, size = 0x4, offset = 0, fixed_abs, tag = 'sflag constant byte address 0x0 - dummy sync flag']
  #allocation11 [shape = 's32[]', space=sflag, size = 0x4, offset = 0, fixed_abs, tag = 'sflag constant byte address 0x0 - dummy sync flag']
  %s0 = inlined_call_operand.vmem [shape: f32[1,64,8], index: 0, kind: input, shape index: {}]
  %s1 = inlined_call_operand.vmem [shape: bf16[8,128], index: 1, kind: input, shape index: {}]
  %s2 = inlined_call_operand.vmem [shape: f32[32,128], index: 2, kind: input, shape index: {}]
  %s3 = inlined_call_operand.vmem [shape: f32[1,128], index: 3, kind: input, shape index: {}]
  %s4 = inlined_call_operand.vmem [shape: f32[1,8,32], index: 4, kind: input, shape index: {}]
  %s5 = inlined_call_operand.vmem [shape: f32[1,8,32], index: 5, kind: input, shape index: {}]
  %s6 = inlined_call_operand.vmem [shape: f32[1,64,32], index: 6, kind: output, shape index: {0}]
  %s7 = inlined_call_operand.hbm [shape: f32[1,8,32], index: 7, kind: output, shape index: {1}]
  %8 = xla_tuple %s6, %s7
  %s9 = sld [smem:[#allocation0]]
  $region106: #{tpu_custom_call.1} parent=0
    _
  %s11 = ssub.s32 1, %s9
  %s12 = scalar_select 0, %s11, %s9
  $region1: #{tpu_custom_call.1} parent=0
    #allocation8 [shape = 'u8[4096]{0}', space=vmem, size = 0x1000, scoped, tag = 'output window, operand 1, single buffered']
    #allocation9 [shape = 's32[1]{0}', space=sflag, size = 0x4, scoped, tag = 'scoped memory for tpu_custom_call.1']
    %13 = vsyncpa [#allocation9], 0
    // Predicated region
    $region2: #{tpu_custom_call.1} parent=1 // pred_check
      _
    $region3: #{tpu_custom_call.1} parent=1 // pred_check_branch
      %15 = sbr.rel (0) target = $region5
    $region4: #{tpu_custom_call.1} parent=1 // pred_region
      _
    $region5: #{tpu_custom_call.1} parent=1 // pred_fallthru
      _
    // Predicated region
    $region6: #{tpu_custom_call.1} parent=1 // pred_check
      _
    $region7: #{tpu_custom_call.1} parent=1 // pred_check_branch
      %17 = sbr.rel (0) target = $region9
    $region8: #{tpu_custom_call.1} parent=1 // pred_region
      _
    $region9: #{tpu_custom_call.1} parent=1 // pred_fallthru
      _
    // Predicated region
    $region10: #{tpu_custom_call.1} parent=1 // pred_check
      _
    $region11: #{tpu_custom_call.1} parent=1 // pred_check_branch
      %19 = sbr.rel (0) target = $region13
    $region12: #{tpu_custom_call.1} parent=1 // pred_region
      _
    $region13: #{tpu_custom_call.1} parent=1 // pred_fallthru
      _
    // Predicated region
    $region14: #{tpu_custom_call.1} parent=1 // pred_check
      _
    $region15: #{tpu_custom_call.1} parent=1 // pred_check_branch
      %21 = sbr.rel (0) target = $region17
    $region16: #{tpu_custom_call.1} parent=1 // pred_region
      _
    $region17: #{tpu_custom_call.1} parent=1 // pred_fallthru
      _
    %p23 = scmp.eq.s32.totalorder 0, 0
    // Predicated region
    $region18: #{tpu_custom_call.1} parent=1 // pred_check
      %p24 = pneg %p23
    $region19: #{tpu_custom_call.1} parent=1 // pred_check_branch
      %26 = sbr.rel (%p24) target = $region21
    $region20: #{tpu_custom_call.1} parent=1 // pred_region
      %p28 = scmp.lt.u32.totalorder 4, 8
      %p29 = pneg %p28
      // Predicated region
      $region22: #{tpu_custom_call.1} parent=20 // pred_check
        _
      $region23: #{tpu_custom_call.1} parent=20 // pred_check_branch
        %31 = sbr.rel (%p28) target = $region25
      $region24: #{tpu_custom_call.1} parent=20 // pred_region
        %s46 = sand.u32 4, 7
        %p47 = scmp.eq.s32.totalorder %s46, 0
        %p48 = pneg %p47
        // Predicated region
        $region37: #{tpu_custom_call.1} parent=24 // pred_check
          _
        $region38: #{tpu_custom_call.1} parent=24 // pred_check_branch
          %50 = sbr.rel (%p47) target = $region40
        $region39: #{tpu_custom_call.1} parent=24 // pred_region
          %s51 = sand.u32 4, 7
          %s52 = ssub.s32 4, %s51
          %s53 = scalar_lea.vmem %s1, %s52
          %s54 = ssub.s32 4, %s51
          %s55 = scalar_lea.vmem [#allocation5], %s54
          %s56 = sshllo.u32 0, %s51
          loop: start=0, step=1, limit=1
          $region41: #{tpu_custom_call.1} parent=39 // loop_pre_header
            _
          $region42: #{tpu_custom_call.1} parent=39 // loop_header
            %s58 = sphi 0, %s62
            %p59 = scmp.ge.s32.totalorder %s58, 1
            %s63 = sphi %s53, %s53
            %s64 = sphi %s55, %s55
          $region43: #{tpu_custom_call.1} parent=39 // loop_header_branch
            %61 = sbr.rel (%p59) target = $region47
          $region44: #{tpu_custom_call.1} parent=39 // loop_body
            %v65 = vld [vmem:[%s63] sm:%s56]
            %66 = vst [vmem:[%s64] sm:%s56] %v65
          $region45: #{tpu_custom_call.1} parent=39 // loop_footer
            %s62 = sadd.s32 1, %s58
          $region46: #{tpu_custom_call.1} parent=39 // loop_footer_branch
            %57 = sbr.rel target = $region42
          $region47: #{tpu_custom_call.1} parent=39 // loop_exit
            _
        $region40: #{tpu_custom_call.1} parent=24 // pred_fallthru
          _
      $region25: #{tpu_custom_call.1} parent=20 // pred_fallthru
        _
      // Predicated region
      $region26: #{tpu_custom_call.1} parent=20 // pred_check
        %p32 = pneg %p28
      $region27: #{tpu_custom_call.1} parent=20 // pred_check_branch
        %34 = sbr.rel (%p32) target = $region29
      $region28: #{tpu_custom_call.1} parent=20 // pred_region
        %s35 = sshllo.u32 0, 4
        loop: start=0, step=1, limit=1
        $region30: #{tpu_custom_call.1} parent=28 // loop_pre_header
          _
        $region31: #{tpu_custom_call.1} parent=28 // loop_header
          %s37 = sphi 0, %s41
          %p38 = scmp.ge.s32.totalorder %s37, 1
          %s42 = sphi %s1, %s1
          %s43 = sphi [#allocation5], [#allocation5]
        $region32: #{tpu_custom_call.1} parent=28 // loop_header_branch
          %40 = sbr.rel (%p38) target = $region36
        $region33: #{tpu_custom_call.1} parent=28 // loop_body
          %v44 = vld [vmem:[%s42] sm:%s35]
          %45 = vst [vmem:[%s43] sm:%s35] %v44
        $region34: #{tpu_custom_call.1} parent=28 // loop_footer
          %s41 = sadd.s32 1, %s37
        $region35: #{tpu_custom_call.1} parent=28 // loop_footer_branch
          %36 = sbr.rel target = $region31
        $region36: #{tpu_custom_call.1} parent=28 // loop_exit
          _
      $region29: #{tpu_custom_call.1} parent=20 // pred_fallthru
        _
      // Predicated region
      $region48: #{tpu_custom_call.1} parent=20 // pred_check
        _
      $region49: #{tpu_custom_call.1} parent=20 // pred_check_branch
        %69 = sbr.rel (0) target = $region51
      $region50: #{tpu_custom_call.1} parent=20 // pred_region
        %70 = vsyncadd [#allocation7], 64
      $region51: #{tpu_custom_call.1} parent=20 // pred_fallthru
        _
      %s71 = scalar_lea.sflag [#allocation7], 1
      %p73 = scmp.lt.u32.totalorder 32, 8
      %p74 = pneg %p73
      // Predicated region
      $region52: #{tpu_custom_call.1} parent=20 // pred_check
        _
      $region53: #{tpu_custom_call.1} parent=20 // pred_check_branch
        %76 = sbr.rel (%p73) target = $region55
      $region54: #{tpu_custom_call.1} parent=20 // pred_region
        %s91 = sand.u32 32, 7
        %p92 = scmp.eq.s32.totalorder %s91, 0
        // Predicated region
        $region67: #{tpu_custom_call.1} parent=54 // pred_check
          %p93 = pneg %p92
        $region68: #{tpu_custom_call.1} parent=54 // pred_check_branch
          %95 = sbr.rel (%p93) target = $region70
        $region69: #{tpu_custom_call.1} parent=54 // pred_region
          loop: start=0, step=1, limit=1
          $region71: #{tpu_custom_call.1} parent=69 // loop_pre_header
            _
          $region72: #{tpu_custom_call.1} parent=69 // loop_header
            %s97 = sphi 0, %s101
            %p98 = scmp.ge.s32.totalorder %s97, 1
            %s102 = sphi %s2, %s2
            %s103 = sphi [#allocation6], [#allocation6]
          $region73: #{tpu_custom_call.1} parent=69 // loop_header_branch
            %100 = sbr.rel (%p98) target = $region77
          $region74: #{tpu_custom_call.1} parent=69 // loop_body
            %v104 = vld [vmem:[%s102] sm:$0xff]
            %105 = vst [vmem:[%s103] sm:$0xff] %v104
            %v106 = vld [vmem:[%s102 + $0x8] sm:$0xff]
            %107 = vst [vmem:[%s103 + $0x8] sm:$0xff] %v106
            %v108 = vld [vmem:[%s102 + $0x10] sm:$0xff]
            %109 = vst [vmem:[%s103 + $0x10] sm:$0xff] %v108
            %v110 = vld [vmem:[%s102 + $0x18] sm:$0xff]
            %111 = vst [vmem:[%s103 + $0x18] sm:$0xff] %v110
          $region75: #{tpu_custom_call.1} parent=69 // loop_footer
            %s101 = sadd.s32 1, %s97
          $region76: #{tpu_custom_call.1} parent=69 // loop_footer_branch
            %96 = sbr.rel target = $region72
          $region77: #{tpu_custom_call.1} parent=69 // loop_exit
            _
        $region70: #{tpu_custom_call.1} parent=54 // pred_fallthru
          _
        %p112 = pneg %p92
        // Predicated region
        $region78: #{tpu_custom_call.1} parent=54 // pred_check
          _
        $region79: #{tpu_custom_call.1} parent=54 // pred_check_branch
          %114 = sbr.rel (%p92) target = $region81
        $region80: #{tpu_custom_call.1} parent=54 // pred_region
          %s115 = sand.u32 32, 7
        $region81: #{tpu_custom_call.1} parent=54 // pred_fallthru
          _
      $region55: #{tpu_custom_call.1} parent=20 // pred_fallthru
        _
      // Predicated region
      $region56: #{tpu_custom_call.1} parent=20 // pred_check
        %p77 = pneg %p73
      $region57: #{tpu_custom_call.1} parent=20 // pred_check_branch
        %79 = sbr.rel (%p77) target = $region59
      $region58: #{tpu_custom_call.1} parent=20 // pred_region
        %s80 = sshllo.u32 0, 32
        loop: start=0, step=1, limit=1
        $region60: #{tpu_custom_call.1} parent=58 // loop_pre_header
          _
        $region61: #{tpu_custom_call.1} parent=58 // loop_header
          %s82 = sphi 0, %s86
          %p83 = scmp.ge.s32.totalorder %s82, 1
          %s87 = sphi %s2, %s2
          %s88 = sphi [#allocation6], [#allocation6]
        $region62: #{tpu_custom_call.1} parent=58 // loop_header_branch
          %85 = sbr.rel (%p83) target = $region66
        $region63: #{tpu_custom_call.1} parent=58 // loop_body
          %v89 = vld [vmem:[%s87] sm:%s80]
          %90 = vst [vmem:[%s88] sm:%s80] %v89
        $region64: #{tpu_custom_call.1} parent=58 // loop_footer
          %s86 = sadd.s32 1, %s82
        $region65: #{tpu_custom_call.1} parent=58 // loop_footer_branch
          %81 = sbr.rel target = $region61
        $region66: #{tpu_custom_call.1} parent=58 // loop_exit
          _
      $region59: #{tpu_custom_call.1} parent=20 // pred_fallthru
        _
      // Predicated region
      $region82: #{tpu_custom_call.1} parent=20 // pred_check
        _
      $region83: #{tpu_custom_call.1} parent=20 // pred_check_branch
        %118 = sbr.rel (0) target = $region85
      $region84: #{tpu_custom_call.1} parent=20 // pred_region
        %119 = vsyncadd %s71, 512
      $region85: #{tpu_custom_call.1} parent=20 // pred_fallthru
        _
      %s120 = smul.u32 4, 1
      %s121 = smul.u32 %s120, 1
      %s122 = sshll.u32 %s121, 4
      %123 = dma.done [#allocation7], %s122
      %s124 = smul.u32 32, 1
      %s125 = sshll.u32 %s124, 4
      %126 = dma.done %s71, %s125
      %v127 = vld [vmem:[%s4] sm:$0xff]
      %vm128 = vcmask 261120
      %129 = vst.msk [vmem:[#allocation2] sm:$0xff] %vm128, %v127
      %v130 = vld [vmem:[%s5] sm:$0xff]
      %131 = vst.msk [vmem:[#allocation3] sm:$0xff] %vm128, %v130
    $region21: #{tpu_custom_call.1} parent=1 // pred_fallthru
      _
    %v132 = vld [vmem:[%s0] sm:$0xff]
    %v133 = vld [vmem:[%s0 + $0x8] sm:$0xff]
    %v134 = vld [vmem:[%s0 + $0x10] sm:$0xff]
    %v135 = vld [vmem:[%s0 + $0x18] sm:$0xff]
    %v136 = vld [vmem:[%s0 + $0x20] sm:$0xff]
    %v137 = vld [vmem:[%s0 + $0x28] sm:$0xff]
    %v138 = vld [vmem:[%s0 + $0x30] sm:$0xff]
    %v139 = vld [vmem:[%s0 + $0x38] sm:$0xff]
    %v140 = vpack.c.bf16 %v133, %v132
    %v141 = vpack.c.bf16 %v135, %v134
    %v142 = vpack.c.bf16 %v137, %v136
    %v143 = vpack.c.bf16 %v139, %v138
    %v144 = vld [vmem:[#allocation5] sm:$0xf]
    %v145 = vld [vmem:[%s3] sm:$0x1]
    %v147 = vlaneseq
    %v148 = vshrl.u32 %v147, 7
    %v149 = vsub.s32 0, %v148
    %v150 = vrot.slane %v145, %v149
    %vm152 = vcmask 64512
    %v154 = vsel %vm152, %v140, 0
    %v157 = vsel %vm152, %v141, 0
    %v160 = vsel %vm152, %v142, 0
    %v163 = vsel %vm152, %v143, 0
    %vm165 = vcmask 1043456
    %v167 = vsel %vm165, %v144, 0
    %169 = vmatprep.subr.bf16.mxu0 0
    %170 = vmatpush1.bf16.msra.mxu0 %v167
    %171 = vmatprep.subr.bf16.mxu0 0
    %172 = vmatpush1.bf16.msra.mxu0 0
    %173 = vmatprep.subr.bf16.mxu0 0
    %174 = vmatpush1.bf16.msra.mxu0 0
    %175 = vmatprep.subr.bf16.mxu0 0
    %176 = vmatpush1.bf16.msra.mxu0 0
    %177 = vmatprep.subr.bf16.mxu0 0
    %178 = vmatpush1.bf16.msra.mxu0 0
    %179 = vmatprep.subr.bf16.mxu0 0
    %180 = vmatpush1.bf16.msra.mxu0 0
    %181 = vmatprep.subr.bf16.mxu0 0
    %182 = vmatpush1.bf16.msra.mxu0 0
    %183 = vmatprep.subr.bf16.mxu0 0
    %184 = vmatpush1.bf16.msra.mxu0 0
    %185 = vmatprep.subr.bf16.mxu0 0
    %186 = vmatpush1.bf16.msra.mxu0 0
    %187 = vmatprep.subr.bf16.mxu0 0
    %188 = vmatpush1.bf16.msra.mxu0 0
    %189 = vmatprep.subr.bf16.mxu0 0
    %190 = vmatpush1.bf16.msra.mxu0 0
    %191 = vmatprep.subr.bf16.mxu0 0
    %192 = vmatpush1.bf16.msra.mxu0 0
    %193 = vmatprep.subr.bf16.mxu0 0
    %194 = vmatpush1.bf16.msra.mxu0 0
    %195 = vmatprep.subr.bf16.mxu0 0
    %196 = vmatpush1.bf16.msra.mxu0 0
    %197 = vmatprep.subr.bf16.mxu0 0
    %198 = vmatpush1.bf16.msra.mxu0 0
    %199 = vmatprep.subr.bf16.mxu0 0
    %200 = vmatpush1.bf16.msra.mxu0 0
    %201 = vmatprep.mubr.bf16.mxu0 0
    %202 = vmatmul.mubr.bf16.gmra.mrb[0].mxu0 %v154
    %v203 = vpop.f32.mrb[0].mxu0
    %v204 = vadd.f32 %v150, %v203
    %v205 = vpop.f32.mrb[0].mxu0
    %v206 = vpop.f32.mrb[0].mxu0
    %v207 = vadd.f32 %v150, %v206
    %v208 = vpop.f32.mrb[0].mxu0
    %209 = vmatprep.mubr.bf16.mxu0 0
    %210 = vmatmul.mubr.bf16.gmra.mrb[0].mxu0 %v157
    %v211 = vpop.f32.mrb[0].mxu0
    %v212 = vadd.f32 %v150, %v211
    %v213 = vpop.f32.mrb[0].mxu0
    %v214 = vpop.f32.mrb[0].mxu0
    %v215 = vadd.f32 %v150, %v214
    %v216 = vpop.f32.mrb[0].mxu0
    %217 = vmatprep.mubr.bf16.mxu0 0
    %218 = vmatmul.mubr.bf16.gmra.mrb[0].mxu0 %v160
    %v219 = vpop.f32.mrb[0].mxu0
    %v220 = vadd.f32 %v150, %v219
    %v221 = vpop.f32.mrb[0].mxu0
    %v222 = vpop.f32.mrb[0].mxu0
    %v223 = vadd.f32 %v150, %v222
    %v224 = vpop.f32.mrb[0].mxu0
    %225 = vmatprep.mubr.bf16.mxu0 0
    %226 = vmatmul.mubr.bf16.gmra.mrb[0].mxu0 %v163
    %v227 = vpop.f32.mrb[0].mxu0
    %v228 = vadd.f32 %v150, %v227
    %v229 = vpop.f32.mrb[0].mxu0
    %v230 = vpop.f32.mrb[0].mxu0
    %v231 = vadd.f32 %v150, %v230
    %v232 = vpop.f32.mrb[0].mxu0
    %233 = vdwg.mxu0
    %234 = vst [vmem:[#allocation4] sm:$0xff] %v204
    %235 = vst [vmem:[#allocation4 + $0x8] sm:$0xff] %v207
    %236 = vst [vmem:[#allocation4 + $0x10] sm:$0xff] %v212
    %237 = vst [vmem:[#allocation4 + $0x18] sm:$0xff] %v215
    %238 = vst [vmem:[#allocation4 + $0x20] sm:$0xff] %v220
    %239 = vst [vmem:[#allocation4 + $0x28] sm:$0xff] %v223
    %240 = vst [vmem:[#allocation4 + $0x30] sm:$0xff] %v228
    %241 = vst [vmem:[#allocation4 + $0x38] sm:$0xff] %v231
    %v242 = vld [vmem:[#allocation6] sm:$0xff]
    %v243 = vld [vmem:[#allocation6 + $0x8] sm:$0xff]
    %v244 = vld [vmem:[#allocation6 + $0x10] sm:$0xff]
    %v245 = vld [vmem:[#allocation6 + $0x18] sm:$0xff]
    %v246 = vld [vmem:[#allocation2] sm:$0xff]
    %v247 = vld [vmem:[#allocation3] sm:$0xff]
    %v248 = vld [vmem:[#allocation4] sm:$0xff]
    %vm249 = vcmask 261120
    %v251 = vsel %vm249, %v246, 0
    %253 = vmatprep.subr.mxu0 0.0
    %254 = vmatpush1.msra.mxu0 %v242
    %255 = vmatprep.subr.mxu0 0.0
    %256 = vmatpush1.msra.mxu0 %v243
    %257 = vmatprep.subr.mxu0 0.0
    %258 = vmatpush1.msra.mxu0 %v244
    %259 = vmatprep.subr.mxu0 0.0
    %260 = vmatpush1.msra.mxu0 %v245
    %261 = vmatprep.subr.mxu0 0.0
    %262 = vmatpush1.msra.mxu0 0.0
    %263 = vmatprep.subr.mxu0 0.0
    %264 = vmatpush1.msra.mxu0 0.0
    %265 = vmatprep.subr.mxu0 0.0
    %266 = vmatpush1.msra.mxu0 0.0
    %267 = vmatprep.subr.mxu0 0.0
    %268 = vmatpush1.msra.mxu0 0.0
    %269 = vmatprep.subr.mxu0 0.0
    %270 = vmatpush1.msra.mxu0 0.0
    %271 = vmatprep.subr.mxu0 0.0
    %272 = vmatpush1.msra.mxu0 0.0
    %273 = vmatprep.subr.mxu0 0.0
    %274 = vmatpush1.msra.mxu0 0.0
    %275 = vmatprep.subr.mxu0 0.0
    %276 = vmatpush1.msra.mxu0 0.0
    %277 = vmatprep.subr.mxu0 0.0
    %278 = vmatpush1.msra.mxu0 0.0
    %279 = vmatprep.subr.mxu0 0.0
    %280 = vmatpush1.msra.mxu0 0.0
    %281 = vmatprep.subr.mxu0 0.0
    %282 = vmatpush1.msra.mxu0 0.0
    %283 = vmatprep.subr.mxu0 0.0
    %284 = vmatpush1.msra.mxu0 0.0
    %285 = vmatprep.subr.mxu0 0.0
    %286 = vmatpush1.msra.mxu0 0.0
    %287 = vmatprep.subr.mxu0 0.0
    %288 = vmatpush1.msra.mxu0 0.0
    %289 = vmatprep.subr.mxu0 0.0
    %290 = vmatpush1.msra.mxu0 0.0
    %291 = vmatprep.subr.mxu0 0.0
    %292 = vmatpush1.msra.mxu0 0.0
    %293 = vmatprep.subr.mxu0 0.0
    %294 = vmatpush1.msra.mxu0 0.0
    %295 = vmatprep.subr.mxu0 0.0
    %296 = vmatpush1.msra.mxu0 0.0
    %297 = vmatprep.subr.mxu0 0.0
    %298 = vmatpush1.msra.mxu0 0.0
    %299 = vmatprep.subr.mxu0 0.0
    %300 = vmatpush1.msra.mxu0 0.0
    %301 = vmatprep.subr.mxu0 0.0
    %302 = vmatpush1.msra.mxu0 0.0
    %303 = vmatprep.subr.mxu0 0.0
    %304 = vmatpush1.msra.mxu0 0.0
    %305 = vmatprep.subr.mxu0 0.0
    %306 = vmatpush1.msra.mxu0 0.0
    %307 = vmatprep.subr.mxu0 0.0
    %308 = vmatpush1.msra.mxu0 0.0
    %309 = vmatprep.subr.mxu0 0.0
    %310 = vmatpush1.msra.mxu0 0.0
    %311 = vmatprep.subr.mxu0 0.0
    %312 = vmatpush1.msra.mxu0 0.0
    %313 = vmatprep.subr.mxu0 0.0
    %314 = vmatpush1.msra.mxu0 0.0
    %315 = vmatprep.subr.mxu0 0.0
    %316 = vmatpush1.msra.mxu0 0.0
    %317 = vmatprep.mubr.f32.mxu0 0.0
    %318 = vmatmul.mubr.f32.gmra.mrb[0].mxu0 %v251
    %v319 = vpop.f32.mrb[0].mxu0
    %v320 = vadd.f32 0.0, %v319
    %v321 = vpop.f32.mrb[0].mxu0
    %322 = vdwg.mxu0
    %v323 = vadd.f32 %v248, %v320
    %v324 = vxor.u32 %v323, 2147483648
    %v325 = vmul.f32 %v324, 1.442695
    %v326 = vpow.pop %v325
    %v327 = vadd.f32 %v326, 1.0
    %v328 = vrcp.pop %v327
    %v329 = vmul.f32 1.0, %v328
    %v330 = vtanh.pop %v323
    %332 = vrot.lane.b32.xlu0 %v247, 32
    %v333 = vpop.permute.xlu0 %332
    %v335 = vmul.f32 %v329, %v333
    %337 = vrot.lane.b32.xlu0 %v330, 32
    %v338 = vpop.permute.xlu0 %337
    %v340 = vmul.f32 %v329, %v338
    %342 = vrot.lane.b32.xlu0 %v340, 32
    %v343 = vpop.permute.xlu0 %342
    %v345 = vadd.f32 %v335, %v343
    %v346 = vtanh.pop %v345
    %348 = vrot.lane.b32.xlu0 %v346, 32
    %v349 = vpop.permute.xlu0 %348
    %v351 = vmul.f32 %v329, %v349
    %353 = vrot.lane.b32.xlu0 %v351, 64
    %v354 = vpop.permute.xlu0 %353
    %356 = vst.msk [vmem:[%s6] sm:$0xff] %vm249, %v354
    %s357 = scalar_lea.vmem [#allocation4], 8
    %v358 = vld [vmem:[%s357] sm:$0xff]
    %v359 = vsel %vm249, %v354, 0
    %361 = vmatprep.subr.mxu0 0.0
    %362 = vmatpush1.msra.mxu0 %v242
    %363 = vmatprep.subr.mxu0 0.0
    %364 = vmatpush1.msra.mxu0 %v243
    %365 = vmatprep.subr.mxu0 0.0
    %366 = vmatpush1.msra.mxu0 %v244
    %367 = vmatprep.subr.mxu0 0.0
    %368 = vmatpush1.msra.mxu0 %v245
    %369 = vmatprep.subr.mxu0 0.0
    %370 = vmatpush1.msra.mxu0 0.0
    %371 = vmatprep.subr.mxu0 0.0
    %372 = vmatpush1.msra.mxu0 0.0
    %373 = vmatprep.subr.mxu0 0.0
    %374 = vmatpush1.msra.mxu0 0.0
    %375 = vmatprep.subr.mxu0 0.0
    %376 = vmatpush1.msra.mxu0 0.0
    %377 = vmatprep.subr.mxu0 0.0
    %378 = vmatpush1.msra.mxu0 0.0
    %379 = vmatprep.subr.mxu0 0.0
    %380 = vmatpush1.msra.mxu0 0.0
    %381 = vmatprep.subr.mxu0 0.0
    %382 = vmatpush1.msra.mxu0 0.0
    %383 = vmatprep.subr.mxu0 0.0
    %384 = vmatpush1.msra.mxu0 0.0
    %385 = vmatprep.subr.mxu0 0.0
    %386 = vmatpush1.msra.mxu0 0.0
    %387 = vmatprep.subr.mxu0 0.0
    %388 = vmatpush1.msra.mxu0 0.0
    %389 = vmatprep.subr.mxu0 0.0
    %390 = vmatpush1.msra.mxu0 0.0
    %391 = vmatprep.subr.mxu0 0.0
    %392 = vmatpush1.msra.mxu0 0.0
    %393 = vmatprep.subr.mxu0 0.0
    %394 = vmatpush1.msra.mxu0 0.0
    %395 = vmatprep.subr.mxu0 0.0
    %396 = vmatpush1.msra.mxu0 0.0
    %397 = vmatprep.subr.mxu0 0.0
    %398 = vmatpush1.msra.mxu0 0.0
    %399 = vmatprep.subr.mxu0 0.0
    %400 = vmatpush1.msra.mxu0 0.0
    %401 = vmatprep.subr.mxu0 0.0
    %402 = vmatpush1.msra.mxu0 0.0
    %403 = vmatprep.subr.mxu0 0.0
    %404 = vmatpush1.msra.mxu0 0.0
    %405 = vmatprep.subr.mxu0 0.0
    %406 = vmatpush1.msra.mxu0 0.0
    %407 = vmatprep.subr.mxu0 0.0
    %408 = vmatpush1.msra.mxu0 0.0
    %409 = vmatprep.subr.mxu0 0.0
    %410 = vmatpush1.msra.mxu0 0.0
    %411 = vmatprep.subr.mxu0 0.0
    %412 = vmatpush1.msra.mxu0 0.0
    %413 = vmatprep.subr.mxu0 0.0
    %414 = vmatpush1.msra.mxu0 0.0
    %415 = vmatprep.subr.mxu0 0.0
    %416 = vmatpush1.msra.mxu0 0.0
    %417 = vmatprep.subr.mxu0 0.0
    %418 = vmatpush1.msra.mxu0 0.0
    %419 = vmatprep.subr.mxu0 0.0
    %420 = vmatpush1.msra.mxu0 0.0
    %421 = vmatprep.subr.mxu0 0.0
    %422 = vmatpush1.msra.mxu0 0.0
    %423 = vmatprep.subr.mxu0 0.0
    %424 = vmatpush1.msra.mxu0 0.0
    %425 = vmatprep.mubr.f32.mxu0 0.0
    %426 = vmatmul.mubr.f32.gmra.mrb[0].mxu0 %v359
    %v427 = vpop.f32.mrb[0].mxu0
    %v428 = vadd.f32 0.0, %v427
    %v429 = vpop.f32.mrb[0].mxu0
    %430 = vdwg.mxu0
    %v431 = vadd.f32 %v358, %v428
    %v432 = vxor.u32 %v431, 2147483648
    %v433 = vmul.f32 %v432, 1.442695
    %v434 = vpow.pop %v433
    %v435 = vadd.f32 %v434, 1.0
    %v436 = vrcp.pop %v435
    %v437 = vmul.f32 1.0, %v436
    %v438 = vtanh.pop %v431
    %v439 = vmul.f32 %v437, %v345
    %441 = vrot.lane.b32.xlu0 %v438, 32
    %v442 = vpop.permute.xlu0 %441
    %v444 = vmul.f32 %v437, %v442
    %446 = vrot.lane.b32.xlu0 %v444, 32
    %v447 = vpop.permute.xlu0 %446
    %v449 = vadd.f32 %v439, %v447
    %v450 = vtanh.pop %v449
    %452 = vrot.lane.b32.xlu0 %v450, 32
    %v453 = vpop.permute.xlu0 %452
    %v455 = vmul.f32 %v437, %v453
    %457 = vrot.lane.b32.xlu0 %v455, 64
    %v458 = vpop.permute.xlu0 %457
    %s460 = scalar_lea.vmem %s6, 8
    %461 = vst.msk [vmem:[%s460] sm:$0xff] %vm249, %v458
    %s462 = scalar_lea.vmem [#allocation4], 16
    %v463 = vld [vmem:[%s462] sm:$0xff]
    %v464 = vsel %vm249, %v458, 0
    %466 = vmatprep.subr.mxu0 0.0
    %467 = vmatpush1.msra.mxu0 %v242
    %468 = vmatprep.subr.mxu0 0.0
    %469 = vmatpush1.msra.mxu0 %v243
    %470 = vmatprep.subr.mxu0 0.0
    %471 = vmatpush1.msra.mxu0 %v244
    %472 = vmatprep.subr.mxu0 0.0
    %473 = vmatpush1.msra.mxu0 %v245
    %474 = vmatprep.subr.mxu0 0.0
    %475 = vmatpush1.msra.mxu0 0.0
    %476 = vmatprep.subr.mxu0 0.0
    %477 = vmatpush1.msra.mxu0 0.0
    %478 = vmatprep.subr.mxu0 0.0
    %479 = vmatpush1.msra.mxu0 0.0
    %480 = vmatprep.subr.mxu0 0.0
    %481 = vmatpush1.msra.mxu0 0.0
    %482 = vmatprep.subr.mxu0 0.0
    %483 = vmatpush1.msra.mxu0 0.0
    %484 = vmatprep.subr.mxu0 0.0
    %485 = vmatpush1.msra.mxu0 0.0
    %486 = vmatprep.subr.mxu0 0.0
    %487 = vmatpush1.msra.mxu0 0.0
    %488 = vmatprep.subr.mxu0 0.0
    %489 = vmatpush1.msra.mxu0 0.0
    %490 = vmatprep.subr.mxu0 0.0
    %491 = vmatpush1.msra.mxu0 0.0
    %492 = vmatprep.subr.mxu0 0.0
    %493 = vmatpush1.msra.mxu0 0.0
    %494 = vmatprep.subr.mxu0 0.0
    %495 = vmatpush1.msra.mxu0 0.0
    %496 = vmatprep.subr.mxu0 0.0
    %497 = vmatpush1.msra.mxu0 0.0
    %498 = vmatprep.subr.mxu0 0.0
    %499 = vmatpush1.msra.mxu0 0.0
    %500 = vmatprep.subr.mxu0 0.0
    %501 = vmatpush1.msra.mxu0 0.0
    %502 = vmatprep.subr.mxu0 0.0
    %503 = vmatpush1.msra.mxu0 0.0
    %504 = vmatprep.subr.mxu0 0.0
    %505 = vmatpush1.msra.mxu0 0.0
    %506 = vmatprep.subr.mxu0 0.0
    %507 = vmatpush1.msra.mxu0 0.0
    %508 = vmatprep.subr.mxu0 0.0
    %509 = vmatpush1.msra.mxu0 0.0
    %510 = vmatprep.subr.mxu0 0.0
    %511 = vmatpush1.msra.mxu0 0.0
    %512 = vmatprep.subr.mxu0 0.0
    %513 = vmatpush1.msra.mxu0 0.0
    %514 = vmatprep.subr.mxu0 0.0
    %515 = vmatpush1.msra.mxu0 0.0
    %516 = vmatprep.subr.mxu0 0.0
    %517 = vmatpush1.msra.mxu0 0.0
    %518 = vmatprep.subr.mxu0 0.0
    %519 = vmatpush1.msra.mxu0 0.0
    %520 = vmatprep.subr.mxu0 0.0
    %521 = vmatpush1.msra.mxu0 0.0
    %522 = vmatprep.subr.mxu0 0.0
    %523 = vmatpush1.msra.mxu0 0.0
    %524 = vmatprep.subr.mxu0 0.0
    %525 = vmatpush1.msra.mxu0 0.0
    %526 = vmatprep.subr.mxu0 0.0
    %527 = vmatpush1.msra.mxu0 0.0
    %528 = vmatprep.subr.mxu0 0.0
    %529 = vmatpush1.msra.mxu0 0.0
    %530 = vmatprep.mubr.f32.mxu0 0.0
    %531 = vmatmul.mubr.f32.gmra.mrb[0].mxu0 %v464
    %v532 = vpop.f32.mrb[0].mxu0
    %v533 = vadd.f32 0.0, %v532
    %v534 = vpop.f32.mrb[0].mxu0
    %535 = vdwg.mxu0
    %v536 = vadd.f32 %v463, %v533
    %v537 = vxor.u32 %v536, 2147483648
    %v538 = vmul.f32 %v537, 1.442695
    %v539 = vpow.pop %v538
    %v540 = vadd.f32 %v539, 1.0
    %v541 = vrcp.pop %v540
    %v542 = vmul.f32 1.0, %v541
    %v543 = vtanh.pop %v536
    %v544 = vmul.f32 %v542, %v449
    %546 = vrot.lane.b32.xlu0 %v543, 32
    %v547 = vpop.permute.xlu0 %546
    %v549 = vmul.f32 %v542, %v547
    %551 = vrot.lane.b32.xlu0 %v549, 32
    %v552 = vpop.permute.xlu0 %551
    %v554 = vadd.f32 %v544, %v552
    %v555 = vtanh.pop %v554
    %557 = vrot.lane.b32.xlu0 %v555, 32
    %v558 = vpop.permute.xlu0 %557
    %v560 = vmul.f32 %v542, %v558
    %562 = vrot.lane.b32.xlu0 %v560, 64
    %v563 = vpop.permute.xlu0 %562
    %s565 = scalar_lea.vmem %s6, 16
    %566 = vst.msk [vmem:[%s565] sm:$0xff] %vm249, %v563
    %s567 = scalar_lea.vmem [#allocation4], 24
    %v568 = vld [vmem:[%s567] sm:$0xff]
    %v569 = vsel %vm249, %v563, 0
    %571 = vmatprep.subr.mxu0 0.0
    %572 = vmatpush1.msra.mxu0 %v242
    %573 = vmatprep.subr.mxu0 0.0
    %574 = vmatpush1.msra.mxu0 %v243
    %575 = vmatprep.subr.mxu0 0.0
    %576 = vmatpush1.msra.mxu0 %v244
    %577 = vmatprep.subr.mxu0 0.0
    %578 = vmatpush1.msra.mxu0 %v245
    %579 = vmatprep.subr.mxu0 0.0
    %580 = vmatpush1.msra.mxu0 0.0
    %581 = vmatprep.subr.mxu0 0.0
    %582 = vmatpush1.msra.mxu0 0.0
    %583 = vmatprep.subr.mxu0 0.0
    %584 = vmatpush1.msra.mxu0 0.0
    %585 = vmatprep.subr.mxu0 0.0
    %586 = vmatpush1.msra.mxu0 0.0
    %587 = vmatprep.subr.mxu0 0.0
    %588 = vmatpush1.msra.mxu0 0.0
    %589 = vmatprep.subr.mxu0 0.0
    %590 = vmatpush1.msra.mxu0 0.0
    %591 = vmatprep.subr.mxu0 0.0
    %592 = vmatpush1.msra.mxu0 0.0
    %593 = vmatprep.subr.mxu0 0.0
    %594 = vmatpush1.msra.mxu0 0.0
    %595 = vmatprep.subr.mxu0 0.0
    %596 = vmatpush1.msra.mxu0 0.0
    %597 = vmatprep.subr.mxu0 0.0
    %598 = vmatpush1.msra.mxu0 0.0
    %599 = vmatprep.subr.mxu0 0.0
    %600 = vmatpush1.msra.mxu0 0.0
    %601 = vmatprep.subr.mxu0 0.0
    %602 = vmatpush1.msra.mxu0 0.0
    %603 = vmatprep.subr.mxu0 0.0
    %604 = vmatpush1.msra.mxu0 0.0
    %605 = vmatprep.subr.mxu0 0.0
    %606 = vmatpush1.msra.mxu0 0.0
    %607 = vmatprep.subr.mxu0 0.0
    %608 = vmatpush1.msra.mxu0 0.0
    %609 = vmatprep.subr.mxu0 0.0
    %610 = vmatpush1.msra.mxu0 0.0
    %611 = vmatprep.subr.mxu0 0.0
    %612 = vmatpush1.msra.mxu0 0.0
    %613 = vmatprep.subr.mxu0 0.0
    %614 = vmatpush1.msra.mxu0 0.0
    %615 = vmatprep.subr.mxu0 0.0
    %616 = vmatpush1.msra.mxu0 0.0
    %617 = vmatprep.subr.mxu0 0.0
    %618 = vmatpush1.msra.mxu0 0.0
    %619 = vmatprep.subr.mxu0 0.0
    %620 = vmatpush1.msra.mxu0 0.0
    %621 = vmatprep.subr.mxu0 0.0
    %622 = vmatpush1.msra.mxu0 0.0
    %623 = vmatprep.subr.mxu0 0.0
    %624 = vmatpush1.msra.mxu0 0.0
    %625 = vmatprep.subr.mxu0 0.0
    %626 = vmatpush1.msra.mxu0 0.0
    %627 = vmatprep.subr.mxu0 0.0
    %628 = vmatpush1.msra.mxu0 0.0
    %629 = vmatprep.subr.mxu0 0.0
    %630 = vmatpush1.msra.mxu0 0.0
    %631 = vmatprep.subr.mxu0 0.0
    %632 = vmatpush1.msra.mxu0 0.0
    %633 = vmatprep.subr.mxu0 0.0
    %634 = vmatpush1.msra.mxu0 0.0
    %635 = vmatprep.mubr.f32.mxu0 0.0
    %636 = vmatmul.mubr.f32.gmra.mrb[0].mxu0 %v569
    %v637 = vpop.f32.mrb[0].mxu0
    %v638 = vadd.f32 0.0, %v637
    %v639 = vpop.f32.mrb[0].mxu0
    %640 = vdwg.mxu0
    %v641 = vadd.f32 %v568, %v638
    %v642 = vxor.u32 %v641, 2147483648
    %v643 = vmul.f32 %v642, 1.442695
    %v644 = vpow.pop %v643
    %v645 = vadd.f32 %v644, 1.0
    %v646 = vrcp.pop %v645
    %v647 = vmul.f32 1.0, %v646
    %v648 = vtanh.pop %v641
    %v649 = vmul.f32 %v647, %v554
    %651 = vrot.lane.b32.xlu0 %v648, 32
    %v652 = vpop.permute.xlu0 %651
    %v654 = vmul.f32 %v647, %v652
    %656 = vrot.lane.b32.xlu0 %v654, 32
    %v657 = vpop.permute.xlu0 %656
    %v659 = vadd.f32 %v649, %v657
    %v660 = vtanh.pop %v659
    %662 = vrot.lane.b32.xlu0 %v660, 32
    %v663 = vpop.permute.xlu0 %662
    %v665 = vmul.f32 %v647, %v663
    %667 = vrot.lane.b32.xlu0 %v665, 64
    %v668 = vpop.permute.xlu0 %667
    %s670 = scalar_lea.vmem %s6, 24
    %671 = vst.msk [vmem:[%s670] sm:$0xff] %vm249, %v668
    %s672 = scalar_lea.vmem [#allocation4], 32
    %v673 = vld [vmem:[%s672] sm:$0xff]
    %v674 = vsel %vm249, %v668, 0
    %676 = vmatprep.subr.mxu0 0.0
    %677 = vmatpush1.msra.mxu0 %v242
    %678 = vmatprep.subr.mxu0 0.0
    %679 = vmatpush1.msra.mxu0 %v243
    %680 = vmatprep.subr.mxu0 0.0
    %681 = vmatpush1.msra.mxu0 %v244
    %682 = vmatprep.subr.mxu0 0.0
    %683 = vmatpush1.msra.mxu0 %v245
    %684 = vmatprep.subr.mxu0 0.0
    %685 = vmatpush1.msra.mxu0 0.0
    %686 = vmatprep.subr.mxu0 0.0
    %687 = vmatpush1.msra.mxu0 0.0
    %688 = vmatprep.subr.mxu0 0.0
    %689 = vmatpush1.msra.mxu0 0.0
    %690 = vmatprep.subr.mxu0 0.0
    %691 = vmatpush1.msra.mxu0 0.0
    %692 = vmatprep.subr.mxu0 0.0
    %693 = vmatpush1.msra.mxu0 0.0
    %694 = vmatprep.subr.mxu0 0.0
    %695 = vmatpush1.msra.mxu0 0.0
    %696 = vmatprep.subr.mxu0 0.0
    %697 = vmatpush1.msra.mxu0 0.0
    %698 = vmatprep.subr.mxu0 0.0
    %699 = vmatpush1.msra.mxu0 0.0
    %700 = vmatprep.subr.mxu0 0.0
    %701 = vmatpush1.msra.mxu0 0.0
    %702 = vmatprep.subr.mxu0 0.0
    %703 = vmatpush1.msra.mxu0 0.0
    %704 = vmatprep.subr.mxu0 0.0
    %705 = vmatpush1.msra.mxu0 0.0
    %706 = vmatprep.subr.mxu0 0.0
    %707 = vmatpush1.msra.mxu0 0.0
    %708 = vmatprep.subr.mxu0 0.0
    %709 = vmatpush1.msra.mxu0 0.0
    %710 = vmatprep.subr.mxu0 0.0
    %711 = vmatpush1.msra.mxu0 0.0
    %712 = vmatprep.subr.mxu0 0.0
    %713 = vmatpush1.msra.mxu0 0.0
    %714 = vmatprep.subr.mxu0 0.0
    %715 = vmatpush1.msra.mxu0 0.0
    %716 = vmatprep.subr.mxu0 0.0
    %717 = vmatpush1.msra.mxu0 0.0
    %718 = vmatprep.subr.mxu0 0.0
    %719 = vmatpush1.msra.mxu0 0.0
    %720 = vmatprep.subr.mxu0 0.0
    %721 = vmatpush1.msra.mxu0 0.0
    %722 = vmatprep.subr.mxu0 0.0
    %723 = vmatpush1.msra.mxu0 0.0
    %724 = vmatprep.subr.mxu0 0.0
    %725 = vmatpush1.msra.mxu0 0.0
    %726 = vmatprep.subr.mxu0 0.0
    %727 = vmatpush1.msra.mxu0 0.0
    %728 = vmatprep.subr.mxu0 0.0
    %729 = vmatpush1.msra.mxu0 0.0
    %730 = vmatprep.subr.mxu0 0.0
    %731 = vmatpush1.msra.mxu0 0.0
    %732 = vmatprep.subr.mxu0 0.0
    %733 = vmatpush1.msra.mxu0 0.0
    %734 = vmatprep.subr.mxu0 0.0
    %735 = vmatpush1.msra.mxu0 0.0
    %736 = vmatprep.subr.mxu0 0.0
    %737 = vmatpush1.msra.mxu0 0.0
    %738 = vmatprep.subr.mxu0 0.0
    %739 = vmatpush1.msra.mxu0 0.0
    %740 = vmatprep.mubr.f32.mxu0 0.0
    %741 = vmatmul.mubr.f32.gmra.mrb[0].mxu0 %v674
    %v742 = vpop.f32.mrb[0].mxu0
    %v743 = vadd.f32 0.0, %v742
    %v744 = vpop.f32.mrb[0].mxu0
    %745 = vdwg.mxu0
    %v746 = vadd.f32 %v673, %v743
    %v747 = vxor.u32 %v746, 2147483648
    %v748 = vmul.f32 %v747, 1.442695
    %v749 = vpow.pop %v748
    %v750 = vadd.f32 %v749, 1.0
    %v751 = vrcp.pop %v750
    %v752 = vmul.f32 1.0, %v751
    %v753 = vtanh.pop %v746
    %v754 = vmul.f32 %v752, %v659
    %756 = vrot.lane.b32.xlu0 %v753, 32
    %v757 = vpop.permute.xlu0 %756
    %v759 = vmul.f32 %v752, %v757
    %761 = vrot.lane.b32.xlu0 %v759, 32
    %v762 = vpop.permute.xlu0 %761
    %v764 = vadd.f32 %v754, %v762
    %v765 = vtanh.pop %v764
    %767 = vrot.lane.b32.xlu0 %v765, 32
    %v768 = vpop.permute.xlu0 %767
    %v770 = vmul.f32 %v752, %v768
    %772 = vrot.lane.b32.xlu0 %v770, 64
    %v773 = vpop.permute.xlu0 %772
    %s775 = scalar_lea.vmem %s6, 32
    %776 = vst.msk [vmem:[%s775] sm:$0xff] %vm249, %v773
    %s777 = scalar_lea.vmem [#allocation4], 40
    %v778 = vld [vmem:[%s777] sm:$0xff]
    %v779 = vsel %vm249, %v773, 0
    %781 = vmatprep.subr.mxu0 0.0
    %782 = vmatpush1.msra.mxu0 %v242
    %783 = vmatprep.subr.mxu0 0.0
    %784 = vmatpush1.msra.mxu0 %v243
    %785 = vmatprep.subr.mxu0 0.0
    %786 = vmatpush1.msra.mxu0 %v244
    %787 = vmatprep.subr.mxu0 0.0
    %788 = vmatpush1.msra.mxu0 %v245
    %789 = vmatprep.subr.mxu0 0.0
    %790 = vmatpush1.msra.mxu0 0.0
    %791 = vmatprep.subr.mxu0 0.0
    %792 = vmatpush1.msra.mxu0 0.0
    %793 = vmatprep.subr.mxu0 0.0
    %794 = vmatpush1.msra.mxu0 0.0
    %795 = vmatprep.subr.mxu0 0.0
    %796 = vmatpush1.msra.mxu0 0.0
    %797 = vmatprep.subr.mxu0 0.0
    %798 = vmatpush1.msra.mxu0 0.0
    %799 = vmatprep.subr.mxu0 0.0
    %800 = vmatpush1.msra.mxu0 0.0
    %801 = vmatprep.subr.mxu0 0.0
    %802 = vmatpush1.msra.mxu0 0.0
    %803 = vmatprep.subr.mxu0 0.0
    %804 = vmatpush1.msra.mxu0 0.0
    %805 = vmatprep.subr.mxu0 0.0
    %806 = vmatpush1.msra.mxu0 0.0
    %807 = vmatprep.subr.mxu0 0.0
    %808 = vmatpush1.msra.mxu0 0.0
    %809 = vmatprep.subr.mxu0 0.0
    %810 = vmatpush1.msra.mxu0 0.0
    %811 = vmatprep.subr.mxu0 0.0
    %812 = vmatpush1.msra.mxu0 0.0
    %813 = vmatprep.subr.mxu0 0.0
    %814 = vmatpush1.msra.mxu0 0.0
    %815 = vmatprep.subr.mxu0 0.0
    %816 = vmatpush1.msra.mxu0 0.0
    %817 = vmatprep.subr.mxu0 0.0
    %818 = vmatpush1.msra.mxu0 0.0
    %819 = vmatprep.subr.mxu0 0.0
    %820 = vmatpush1.msra.mxu0 0.0
    %821 = vmatprep.subr.mxu0 0.0
    %822 = vmatpush1.msra.mxu0 0.0
    %823 = vmatprep.subr.mxu0 0.0
    %824 = vmatpush1.msra.mxu0 0.0
    %825 = vmatprep.subr.mxu0 0.0
    %826 = vmatpush1.msra.mxu0 0.0
    %827 = vmatprep.subr.mxu0 0.0
    %828 = vmatpush1.msra.mxu0 0.0
    %829 = vmatprep.subr.mxu0 0.0
    %830 = vmatpush1.msra.mxu0 0.0
    %831 = vmatprep.subr.mxu0 0.0
    %832 = vmatpush1.msra.mxu0 0.0
    %833 = vmatprep.subr.mxu0 0.0
    %834 = vmatpush1.msra.mxu0 0.0
    %835 = vmatprep.subr.mxu0 0.0
    %836 = vmatpush1.msra.mxu0 0.0
    %837 = vmatprep.subr.mxu0 0.0
    %838 = vmatpush1.msra.mxu0 0.0
    %839 = vmatprep.subr.mxu0 0.0
    %840 = vmatpush1.msra.mxu0 0.0
    %841 = vmatprep.subr.mxu0 0.0
    %842 = vmatpush1.msra.mxu0 0.0
    %843 = vmatprep.subr.mxu0 0.0
    %844 = vmatpush1.msra.mxu0 0.0
    %845 = vmatprep.mubr.f32.mxu0 0.0
    %846 = vmatmul.mubr.f32.gmra.mrb[0].mxu0 %v779
    %v847 = vpop.f32.mrb[0].mxu0
    %v848 = vadd.f32 0.0, %v847
    %v849 = vpop.f32.mrb[0].mxu0
    %850 = vdwg.mxu0
    %v851 = vadd.f32 %v778, %v848
    %v852 = vxor.u32 %v851, 2147483648
    %v853 = vmul.f32 %v852, 1.442695
    %v854 = vpow.pop %v853
    %v855 = vadd.f32 %v854, 1.0
    %v856 = vrcp.pop %v855
    %v857 = vmul.f32 1.0, %v856
    %v858 = vtanh.pop %v851
    %v859 = vmul.f32 %v857, %v764
    %861 = vrot.lane.b32.xlu0 %v858, 32
    %v862 = vpop.permute.xlu0 %861
    %v864 = vmul.f32 %v857, %v862
    %866 = vrot.lane.b32.xlu0 %v864, 32
    %v867 = vpop.permute.xlu0 %866
    %v869 = vadd.f32 %v859, %v867
    %v870 = vtanh.pop %v869
    %872 = vrot.lane.b32.xlu0 %v870, 32
    %v873 = vpop.permute.xlu0 %872
    %v875 = vmul.f32 %v857, %v873
    %877 = vrot.lane.b32.xlu0 %v875, 64
    %v878 = vpop.permute.xlu0 %877
    %s880 = scalar_lea.vmem %s6, 40
    %881 = vst.msk [vmem:[%s880] sm:$0xff] %vm249, %v878
    %s882 = scalar_lea.vmem [#allocation4], 48
    %v883 = vld [vmem:[%s882] sm:$0xff]
    %v884 = vsel %vm249, %v878, 0
    %886 = vmatprep.subr.mxu0 0.0
    %887 = vmatpush1.msra.mxu0 %v242
    %888 = vmatprep.subr.mxu0 0.0
    %889 = vmatpush1.msra.mxu0 %v243
    %890 = vmatprep.subr.mxu0 0.0
    %891 = vmatpush1.msra.mxu0 %v244
    %892 = vmatprep.subr.mxu0 0.0
    %893 = vmatpush1.msra.mxu0 %v245
    %894 = vmatprep.subr.mxu0 0.0
    %895 = vmatpush1.msra.mxu0 0.0
    %896 = vmatprep.subr.mxu0 0.0
    %897 = vmatpush1.msra.mxu0 0.0
    %898 = vmatprep.subr.mxu0 0.0
    %899 = vmatpush1.msra.mxu0 0.0
    %900 = vmatprep.subr.mxu0 0.0
    %901 = vmatpush1.msra.mxu0 0.0
    %902 = vmatprep.subr.mxu0 0.0
    %903 = vmatpush1.msra.mxu0 0.0
    %904 = vmatprep.subr.mxu0 0.0
    %905 = vmatpush1.msra.mxu0 0.0
    %906 = vmatprep.subr.mxu0 0.0
    %907 = vmatpush1.msra.mxu0 0.0
    %908 = vmatprep.subr.mxu0 0.0
    %909 = vmatpush1.msra.mxu0 0.0
    %910 = vmatprep.subr.mxu0 0.0
    %911 = vmatpush1.msra.mxu0 0.0
    %912 = vmatprep.subr.mxu0 0.0
    %913 = vmatpush1.msra.mxu0 0.0
    %914 = vmatprep.subr.mxu0 0.0
    %915 = vmatpush1.msra.mxu0 0.0
    %916 = vmatprep.subr.mxu0 0.0
    %917 = vmatpush1.msra.mxu0 0.0
    %918 = vmatprep.subr.mxu0 0.0
    %919 = vmatpush1.msra.mxu0 0.0
    %920 = vmatprep.subr.mxu0 0.0
    %921 = vmatpush1.msra.mxu0 0.0
    %922 = vmatprep.subr.mxu0 0.0
    %923 = vmatpush1.msra.mxu0 0.0
    %924 = vmatprep.subr.mxu0 0.0
    %925 = vmatpush1.msra.mxu0 0.0
    %926 = vmatprep.subr.mxu0 0.0
    %927 = vmatpush1.msra.mxu0 0.0
    %928 = vmatprep.subr.mxu0 0.0
    %929 = vmatpush1.msra.mxu0 0.0
    %930 = vmatprep.subr.mxu0 0.0
    %931 = vmatpush1.msra.mxu0 0.0
    %932 = vmatprep.subr.mxu0 0.0
    %933 = vmatpush1.msra.mxu0 0.0
    %934 = vmatprep.subr.mxu0 0.0
    %935 = vmatpush1.msra.mxu0 0.0
    %936 = vmatprep.subr.mxu0 0.0
    %937 = vmatpush1.msra.mxu0 0.0
    %938 = vmatprep.subr.mxu0 0.0
    %939 = vmatpush1.msra.mxu0 0.0
    %940 = vmatprep.subr.mxu0 0.0
    %941 = vmatpush1.msra.mxu0 0.0
    %942 = vmatprep.subr.mxu0 0.0
    %943 = vmatpush1.msra.mxu0 0.0
    %944 = vmatprep.subr.mxu0 0.0
    %945 = vmatpush1.msra.mxu0 0.0
    %946 = vmatprep.subr.mxu0 0.0
    %947 = vmatpush1.msra.mxu0 0.0
    %948 = vmatprep.subr.mxu0 0.0
    %949 = vmatpush1.msra.mxu0 0.0
    %950 = vmatprep.mubr.f32.mxu0 0.0
    %951 = vmatmul.mubr.f32.gmra.mrb[0].mxu0 %v884
    %v952 = vpop.f32.mrb[0].mxu0
    %v953 = vadd.f32 0.0, %v952
    %v954 = vpop.f32.mrb[0].mxu0
    %955 = vdwg.mxu0
    %v956 = vadd.f32 %v883, %v953
    %v957 = vxor.u32 %v956, 2147483648
    %v958 = vmul.f32 %v957, 1.442695
    %v959 = vpow.pop %v958
    %v960 = vadd.f32 %v959, 1.0
    %v961 = vrcp.pop %v960
    %v962 = vmul.f32 1.0, %v961
    %v963 = vtanh.pop %v956
    %v964 = vmul.f32 %v962, %v869
    %966 = vrot.lane.b32.xlu0 %v963, 32
    %v967 = vpop.permute.xlu0 %966
    %v969 = vmul.f32 %v962, %v967
    %971 = vrot.lane.b32.xlu0 %v969, 32
    %v972 = vpop.permute.xlu0 %971
    %v974 = vadd.f32 %v964, %v972
    %v975 = vtanh.pop %v974
    %977 = vrot.lane.b32.xlu0 %v975, 32
    %v978 = vpop.permute.xlu0 %977
    %v980 = vmul.f32 %v962, %v978
    %982 = vrot.lane.b32.xlu0 %v980, 64
    %v983 = vpop.permute.xlu0 %982
    %s985 = scalar_lea.vmem %s6, 48
    %986 = vst.msk [vmem:[%s985] sm:$0xff] %vm249, %v983
    %s987 = scalar_lea.vmem [#allocation4], 56
    %v988 = vld [vmem:[%s987] sm:$0xff]
    %v989 = vsel %vm249, %v983, 0
    %991 = vmatprep.subr.mxu0 0.0
    %992 = vmatpush1.msra.mxu0 %v242
    %993 = vmatprep.subr.mxu0 0.0
    %994 = vmatpush1.msra.mxu0 %v243
    %995 = vmatprep.subr.mxu0 0.0
    %996 = vmatpush1.msra.mxu0 %v244
    %997 = vmatprep.subr.mxu0 0.0
    %998 = vmatpush1.msra.mxu0 %v245
    %999 = vmatprep.subr.mxu0 0.0
    %1000 = vmatpush1.msra.mxu0 0.0
    %1001 = vmatprep.subr.mxu0 0.0
    %1002 = vmatpush1.msra.mxu0 0.0
    %1003 = vmatprep.subr.mxu0 0.0
    %1004 = vmatpush1.msra.mxu0 0.0
    %1005 = vmatprep.subr.mxu0 0.0
    %1006 = vmatpush1.msra.mxu0 0.0
    %1007 = vmatprep.subr.mxu0 0.0
    %1008 = vmatpush1.msra.mxu0 0.0
    %1009 = vmatprep.subr.mxu0 0.0
    %1010 = vmatpush1.msra.mxu0 0.0
    %1011 = vmatprep.subr.mxu0 0.0
    %1012 = vmatpush1.msra.mxu0 0.0
    %1013 = vmatprep.subr.mxu0 0.0
    %1014 = vmatpush1.msra.mxu0 0.0
    %1015 = vmatprep.subr.mxu0 0.0
    %1016 = vmatpush1.msra.mxu0 0.0
    %1017 = vmatprep.subr.mxu0 0.0
    %1018 = vmatpush1.msra.mxu0 0.0
    %1019 = vmatprep.subr.mxu0 0.0
    %1020 = vmatpush1.msra.mxu0 0.0
    %1021 = vmatprep.subr.mxu0 0.0
    %1022 = vmatpush1.msra.mxu0 0.0
    %1023 = vmatprep.subr.mxu0 0.0
    %1024 = vmatpush1.msra.mxu0 0.0
    %1025 = vmatprep.subr.mxu0 0.0
    %1026 = vmatpush1.msra.mxu0 0.0
    %1027 = vmatprep.subr.mxu0 0.0
    %1028 = vmatpush1.msra.mxu0 0.0
    %1029 = vmatprep.subr.mxu0 0.0
    %1030 = vmatpush1.msra.mxu0 0.0
    %1031 = vmatprep.subr.mxu0 0.0
    %1032 = vmatpush1.msra.mxu0 0.0
    %1033 = vmatprep.subr.mxu0 0.0
    %1034 = vmatpush1.msra.mxu0 0.0
    %1035 = vmatprep.subr.mxu0 0.0
    %1036 = vmatpush1.msra.mxu0 0.0
    %1037 = vmatprep.subr.mxu0 0.0
    %1038 = vmatpush1.msra.mxu0 0.0
    %1039 = vmatprep.subr.mxu0 0.0
    %1040 = vmatpush1.msra.mxu0 0.0
    %1041 = vmatprep.subr.mxu0 0.0
    %1042 = vmatpush1.msra.mxu0 0.0
    %1043 = vmatprep.subr.mxu0 0.0
    %1044 = vmatpush1.msra.mxu0 0.0
    %1045 = vmatprep.subr.mxu0 0.0
    %1046 = vmatpush1.msra.mxu0 0.0
    %1047 = vmatprep.subr.mxu0 0.0
    %1048 = vmatpush1.msra.mxu0 0.0
    %1049 = vmatprep.subr.mxu0 0.0
    %1050 = vmatpush1.msra.mxu0 0.0
    %1051 = vmatprep.subr.mxu0 0.0
    %1052 = vmatpush1.msra.mxu0 0.0
    %1053 = vmatprep.subr.mxu0 0.0
    %1054 = vmatpush1.msra.mxu0 0.0
    %1055 = vmatprep.mubr.f32.mxu0 0.0
    %1056 = vmatmul.mubr.f32.gmra.mrb[0].mxu0 %v989
    %v1057 = vpop.f32.mrb[0].mxu0
    %v1058 = vadd.f32 0.0, %v1057
    %v1059 = vpop.f32.mrb[0].mxu0
    %1060 = vdwg.mxu0
    %v1061 = vadd.f32 %v988, %v1058
    %v1062 = vxor.u32 %v1061, 2147483648
    %v1063 = vmul.f32 %v1062, 1.442695
    %v1064 = vpow.pop %v1063
    %v1065 = vadd.f32 %v1064, 1.0
    %v1066 = vrcp.pop %v1065
    %v1067 = vmul.f32 1.0, %v1066
    %v1068 = vtanh.pop %v1061
    %v1069 = vmul.f32 %v1067, %v974
    %1071 = vrot.lane.b32.xlu0 %v1068, 32
    %v1072 = vpop.permute.xlu0 %1071
    %v1074 = vmul.f32 %v1067, %v1072
    %1076 = vrot.lane.b32.xlu0 %v1074, 32
    %v1077 = vpop.permute.xlu0 %1076
    %v1079 = vadd.f32 %v1069, %v1077
    %v1080 = vtanh.pop %v1079
    %1082 = vrot.lane.b32.xlu0 %v1080, 32
    %v1083 = vpop.permute.xlu0 %1082
    %v1085 = vmul.f32 %v1067, %v1083
    %1087 = vrot.lane.b32.xlu0 %v1085, 64
    %v1088 = vpop.permute.xlu0 %1087
    %s1090 = scalar_lea.vmem %s6, 56
    %1091 = vst.msk [vmem:[%s1090] sm:$0xff] %vm249, %v1088
    %1092 = vst.msk [vmem:[#allocation2] sm:$0xff] %vm249, %v1088
    %1094 = vrot.lane.b32.xlu0 %v1079, 96
    %v1095 = vpop.permute.xlu0 %1094
    %1097 = vst.msk [vmem:[#allocation3] sm:$0xff] %vm249, %v1095
    // Predicated region
    $region86: #{tpu_custom_call.1} parent=1 // pred_check
      %p1098 = pneg %p23
    $region87: #{tpu_custom_call.1} parent=1 // pred_check_branch
      %1100 = sbr.rel (%p1098) target = $region89
    $region88: #{tpu_custom_call.1} parent=1 // pred_region
      %1101 = vst.msk [vmem:[#allocation8] sm:$0xff] %vm249, %v1095
    $region89: #{tpu_custom_call.1} parent=1 // pred_fallthru
      _
    // Predicated region
    $region90: #{tpu_custom_call.1} parent=1 // pred_check
      _
    $region91: #{tpu_custom_call.1} parent=1 // pred_check_branch
      %1103 = sbr.rel (0) target = $region93
    $region92: #{tpu_custom_call.1} parent=1 // pred_region
      _
    $region93: #{tpu_custom_call.1} parent=1 // pred_fallthru
      _
    // Predicated region
    $region94: #{tpu_custom_call.1} parent=1 // pred_check
      _
    $region95: #{tpu_custom_call.1} parent=1 // pred_check_branch
      %1105 = sbr.rel (0) target = $region97
    $region96: #{tpu_custom_call.1} parent=1 // pred_region
      %s1107 = ssub.s32 128, 128
      %1108 = vsyncadd [#allocation9], %s1107
      %s1110 = sshll.u32 [#allocation8], 4
      %s1111 = int_to_ptr.vmem [resolvable:$true] %s1110
      %1113 = dma.vmem_to_hbm [thread:$0]  %s1111, 128, %s7, [#allocation9]
    $region97: #{tpu_custom_call.1} parent=1 // pred_fallthru
      _
    // Predicated region
    $region98: #{tpu_custom_call.1} parent=1 // pred_check
      _
    $region99: #{tpu_custom_call.1} parent=1 // pred_check_branch
      %1115 = sbr.rel (0) target = $region101
    $region100: #{tpu_custom_call.1} parent=1 // pred_region
      _
    $region101: #{tpu_custom_call.1} parent=1 // pred_fallthru
      _
    // Predicated region
    $region102: #{tpu_custom_call.1} parent=1 // pred_check
      _
    $region103: #{tpu_custom_call.1} parent=1 // pred_check_branch
      %1117 = sbr.rel (0) target = $region105
    $region104: #{tpu_custom_call.1} parent=1 // pred_region
      %1118 = dma.done [#allocation9], 128
    $region105: #{tpu_custom_call.1} parent=1 // pred_fallthru
      _
    %1119 = vsyncpa [#allocation9], 1
  %1120 = vsyncmov [#allocation7]
  %s1121 = vpop.sfrf %1120
  %p1122 = scmp.eq.s32.totalorder %s1121, 0
  %p1123 = pneg %p1122
  %1125 = shalt.err (%p1123)
  %s1126 = scalar_lea.sflag [#allocation7], 1
  %1127 = vsyncmov %s1126
  %s1128 = vpop.sfrf %1127
  %p1129 = scmp.eq.s32.totalorder %s1128, 0
  %p1130 = pneg %p1129
  %1132 = shalt.err (%p1130)

</llo_original>
